<compile_context>
chip_gen: v5e
topology: v5e:2x2
jax: 0.10.0
libtpu: 0.0.40
codegen_flags: <defaults>
</compile_context>

<pallas_src>
import jax
import jax.numpy as jnp
from jax import lax
from jax.experimental import pallas as pl
from jax.experimental.pallas import tpu as pltpu


# ----------------------------------------------------------------------------
# Fused Pallas kernel: interleaved layer0+layer1 recurrence + fc, one call
# ----------------------------------------------------------------------------
def fused_lstm_fc_kernel(
    x_ref,       # (T*Bp, E)   time-major flattened embedded input (batch padded)
    wih0_ref,    # (E, 4H)     layer-0 input->hidden (pre-transposed, g cols x2)
    whh0_ref,    # (H, 4H)     layer-0 hidden->hidden (pre-transposed, g cols x2)
    b0_ref,      # (1, 4H)     layer-0 b_ih + b_hh (g cols x2)
    wih1_ref,    # (H, 4H)     layer-1 input->hidden
    whh1_ref,    # (H, 4H)     layer-1 hidden->hidden
    b1_ref,      # (1, 4H)     layer-1 b_ih + b_hh
    fcw_ref,     # (H, Vp)     fc weight (pre-transposed, vocab padded to 128)
    fcb_ref,     # (1, Vp)     fc bias (vocab padded)
    out_ref,     # (Bp, Vp)    padded logits
    xproj_sc,    # (T*Bp, 4H)  VMEM scratch: hoisted layer-0 input projection
):
    TBp, _ = x_ref.shape
    H = whh0_ref.shape[0]
    Bp = out_ref.shape[0]
    T = TBp // Bp

    def lstm_cell(gates, c):
        # PyTorch gate order i, f, g, o laid out on lanes (4H = 128).
        # g-gate columns were pre-scaled by 2 in the wrapper, so one sigmoid
        # over the full 128-lane tile covers all gates; the g slice is then
        # fixed up with tanh(x) = 2*sigmoid(2x) - 1.
        act = jax.nn.sigmoid(gates)
        i_g = act[:, 0 * H:1 * H]
        f_g = act[:, 1 * H:2 * H]
        g_g = 2.0 * act[:, 2 * H:3 * H] - 1.0
        o_g = act[:, 3 * H:4 * H]
        c_new = f_g * c + i_g * g_g
        h_new = o_g * jnp.tanh(c_new)
        return h_new, c_new

    # ---- Layer 0: hoisted input projection (one well-shaped matmul) --------
    xproj_sc[...] = (
        jnp.dot(x_ref[...], wih0_ref[...], preferred_element_type=jnp.float32)
        + b0_ref[...]
    )

    whh0 = whh0_ref[...]
    wih1 = wih1_ref[...]
    whh1 = whh1_ref[...]
    b1 = b1_ref[...]

    zeros = jnp.zeros((Bp, H), jnp.float32)

    # ---- Interleaved 2-layer recurrence -------------------------------------
    def step(t, carry):
        h0, c0, h1, c1 = carry
        row = pl.multiple_of(t * Bp, Bp)          # 8-aligned sublane offset
        gates0 = xproj_sc[pl.ds(row, Bp), :] + jnp.dot(
            h0, whh0, preferred_element_type=jnp.float32)
        h0n, c0n = lstm_cell(gates0, c0)
        gates1 = (
            jnp.dot(h0n, wih1, preferred_element_type=jnp.float32)
            + jnp.dot(h1, whh1, preferred_element_type=jnp.float32)
            + b1
        )
        h1n, c1n = lstm_cell(gates1, c1)
        return (h0n, c0n, h1n, c1n)

    # T is small here; for long sequences switch to partial unroll (e.g. 4-8).
    _, _, h1, _ = lax.fori_loop(0, T, step, (zeros, zeros, zeros, zeros),
                                unroll=True)

    # ---- Fused fc on the final hidden only (lane-dense, unmasked store) -----
    out_ref[...] = (
        jnp.dot(h1, fcw_ref[...], preferred_element_type=jnp.float32)
        + fcb_ref[...]
    ).astype(out_ref.dtype)


# ----------------------------------------------------------------------------
# Wrapper
# ----------------------------------------------------------------------------
def _fused_call(x2d, wih0, whh0, b0, wih1, whh1, b1, fcw, fcb, *, T, Bp):
    H = whh0.shape[0]
    Vp = fcw.shape[1]
    vmem = lambda: pl.BlockSpec(memory_space=pltpu.MemorySpace.VMEM)
    return pl.pallas_call(
        fused_lstm_fc_kernel,
        out_shape=jax.ShapeDtypeStruct((Bp, Vp), jnp.float32),
        in_specs=[vmem() for _ in range(9)],
        out_specs=vmem(),
        scratch_shapes=[
            pltpu.VMEM((T * Bp, 4 * H), jnp.float32),
        ],
    )(x2d, wih0, whh0, b0, wih1, whh1, b1, fcw, fcb)


def _scale_g_cols(w):
    """Scale the g-gate column block [2H:3H) by 2 (tanh via 2*sigmoid(2x)-1)."""
    four_h = w.shape[-1]
    h = four_h // 4
    scale = jnp.ones((four_h,), w.dtype).at[2 * h:3 * h].set(2.0)
    return w * scale


@jax.jit
def enhanced_lstm_forward(x_ids, params):
    """x_ids: (B, T) int32 token ids -> logits (B, vocab_size)."""
    B, T = x_ids.shape
    E = params["embedding"].shape[1]
    H = params["w_hh_l0"].shape[1]
    V = params["fc_w"].shape[0]
    Bp = max(8, ((B + 7) // 8) * 8)        # pad batch to a full sublane group
    Vp = pl.cdiv(V, 128) * 128             # lane-dense padded vocab

    # Embedding gather directly into time-major layout; dropout = identity (eval).
    emb_tbe = jnp.take(params["embedding"], x_ids.T, axis=0)      # (T, B, E)
    x_pad = jnp.zeros((T, Bp, E), jnp.float32).at[:, :B, :].set(emb_tbe)
    x2d = x_pad.reshape(T * Bp, E)

    # Pre-transpose weights once; scale g-gate columns by 2 for the fused sigmoid.
    wih0 = _scale_g_cols(params["w_ih_l0"].T)      # (E, 4H)
    whh0 = _scale_g_cols(params["w_hh_l0"].T)      # (H, 4H)
    b0 = _scale_g_cols(params["b_l0"])             # (1, 4H)
    wih1 = _scale_g_cols(params["w_ih_l1"].T)      # (H, 4H)
    whh1 = _scale_g_cols(params["w_hh_l1"].T)      # (H, 4H)
    b1 = _scale_g_cols(params["b_l1"])             # (1, 4H)

    # Lane-dense fc: pad vocab axis to a multiple of 128.
    fcw = jnp.zeros((H, Vp), jnp.float32).at[:, :V].set(params["fc_w"].T)
    fcb = jnp.zeros((1, Vp), jnp.float32).at[:, :V].set(params["fc_b"])

    out_pad = _fused_call(x2d, wih0, whh0, b0, wih1, whh1, b1, fcw, fcb,
                          T=T, Bp=Bp)
    return out_pad[:B, :V]


# ----------------------------------------------------------------------------
# Pure-JAX reference (for correctness check; native tanh, unscaled weights)
# ----------------------------------------------------------------------------
def lstm_layer_ref(x_tbe, w_ih, w_hh, b):
    T, B, _ = x_tbe.shape
    H = w_hh.shape[1]

    def step(carry, x_t):
        h, c = carry
        gates = x_t @ w_ih.T + h @ w_hh.T + b[0]
        i_g = jax.nn.sigmoid(gates[:, 0 * H:1 * H])
        f_g = jax.nn.sigmoid(gates[:, 1 * H:2 * H])
        g_g = jnp.tanh(gates[:, 2 * H:3 * H])
        o_g = jax.nn.sigmoid(gates[:, 3 * H:4 * H])
        c_new = f_g * c + i_g * g_g
        h_new = o_g * jnp.tanh(c_new)
        return (h_new, c_new), h_new

    init = (jnp.zeros((B, H), jnp.float32), jnp.zeros((B, H), jnp.float32))
    _, outs = lax.scan(step, init, x_tbe)
    return outs


def enhanced_lstm_forward_ref(x_ids, params):
    emb = jnp.take(params["embedding"], x_ids, axis=0)
    x = jnp.transpose(emb, (1, 0, 2))
    for layer in range(2):
        x = lstm_layer_ref(
            x, params[f"w_ih_l{layer}"], params[f"w_hh_l{layer}"],
            params[f"b_l{layer}"])
    hidden = x[-1]
    return hidden @ params["fc_w"].T + params["fc_b"][0]


# ----------------------------------------------------------------------------
# Deterministic parameter init (shapes per nn.Module __init__)
# ----------------------------------------------------------------------------
def init_params(key, vocab_size, embedding_dim, hidden_dim):
    keys = jax.random.split(key, 12)
    init_range = 0.1
    k = 1.0 / jnp.sqrt(hidden_dim)  # PyTorch LSTM default init range

    params = {
        "embedding": jax.random.uniform(
            keys[0], (vocab_size, embedding_dim), jnp.float32,
            -init_range, init_range),
        "fc_w": jax.random.uniform(
            keys[1], (vocab_size, hidden_dim), jnp.float32,
            -init_range, init_range),
        # fc bias zeroed to match EnhancedLSTMModel.init_weights().
        "fc_b": jnp.zeros((1, vocab_size), jnp.float32),
    }
    in_dims = [embedding_dim, hidden_dim]
    for layer in range(2):
        base = 2 + layer * 4
        params[f"w_ih_l{layer}"] = jax.random.uniform(
            keys[base + 0], (4 * hidden_dim, in_dims[layer]), jnp.float32, -k, k)
        params[f"w_hh_l{layer}"] = jax.random.uniform(
            keys[base + 1], (4 * hidden_dim, hidden_dim), jnp.float32, -k, k)
        b_ih = jax.random.uniform(
            keys[base + 2], (4 * hidden_dim,), jnp.float32, -k, k)
        b_hh = jax.random.uniform(
            keys[base + 3], (4 * hidden_dim,), jnp.float32, -k, k)
        params[f"b_l{layer}"] = (b_ih + b_hh).reshape(1, 4 * hidden_dim)
    return params


if __name__ == "__main__":
    VOCAB = 64
    EMB = 32
    HID = 32
    BATCH = 2
    SEQ = 8

    key = jax.random.PRNGKey(0)
    pkey, xkey = jax.random.split(key)
    params = init_params(pkey, VOCAB, EMB, HID)
    x_ids = jax.random.randint(xkey, (BATCH, SEQ), 0, VOCAB, dtype=jnp.int32)

    logits = enhanced_lstm_forward(x_ids, params)
    logits = jax.block_until_ready(logits)

    ref = enhanced_lstm_forward_ref(x_ids, params)
    assert logits.shape == (BATCH, VOCAB)
    assert jnp.allclose(logits, ref, atol=1e-4, rtol=1e-4), "mismatch vs reference"

    print("KERNEL_OK")
</pallas_src>

<mosaic_0001>
module attributes {stable_mosaic.version = 11 : i64} {
  func.func @fused_lstm_fc_kernel(%arg0: memref<64x32xf32, #tpu.memory_space<vmem>>, %arg1: memref<32x128xf32, #tpu.memory_space<vmem>>, %arg2: memref<32x128xf32, #tpu.memory_space<vmem>>, %arg3: memref<1x128xf32, #tpu.memory_space<vmem>>, %arg4: memref<32x128xf32, #tpu.memory_space<vmem>>, %arg5: memref<32x128xf32, #tpu.memory_space<vmem>>, %arg6: memref<1x128xf32, #tpu.memory_space<vmem>>, %arg7: memref<32x128xf32, #tpu.memory_space<vmem>>, %arg8: memref<1x128xf32, #tpu.memory_space<vmem>>, %arg9: memref<8x128xf32, #tpu.memory_space<vmem>>, %arg10: memref<64x128xf32, #tpu.memory_space<vmem>>) attributes {dimension_semantics = [], scalar_prefetch = 0 : i64, scratch_operands = 1 : i64, tpu.core_type = #tpu.core_type<tc>} {
    %c0 = arith.constant 0 : index
    %c0_0 = arith.constant 0 : index
    %0 = vector.load %arg0[%c0, %c0_0] : memref<64x32xf32, #tpu.memory_space<vmem>>, vector<64x32xf32>
    %c0_1 = arith.constant 0 : index
    %c0_2 = arith.constant 0 : index
    %1 = vector.load %arg1[%c0_1, %c0_2] : memref<32x128xf32, #tpu.memory_space<vmem>>, vector<32x128xf32>
    %cst = arith.constant dense<0.000000e+00> : vector<64x128xf32>
    %2 = tpu.matmul %0, %1, %cst {dimension_numbers = #tpu.dot_dimension_numbers<[1], [0], [0], [1], [0, 0, 1, 1], [], []>} : vector<64x32xf32>, vector<32x128xf32>, vector<64x128xf32> -> vector<64x128xf32>
    %c0_3 = arith.constant 0 : index
    %c0_4 = arith.constant 0 : index
    %3 = vector.load %arg3[%c0_3, %c0_4] : memref<1x128xf32, #tpu.memory_space<vmem>>, vector<1x128xf32>
    %4 = vector.broadcast %3 : vector<1x128xf32> to vector<64x128xf32>
    %5 = arith.addf %2, %4 : vector<64x128xf32>
    %c0_5 = arith.constant 0 : index
    %c0_6 = arith.constant 0 : index
    %6 = vector.load %arg10[%c0_5, %c0_6] : memref<64x128xf32, #tpu.memory_space<vmem>>, vector<64x128xf32>
    tpu.vector_store %arg10[%c0_5, %c0_6], %5 {strides = array<i32>} : memref<64x128xf32, #tpu.memory_space<vmem>>, vector<64x128xf32>,
    %c0_7 = arith.constant 0 : index
    %c0_8 = arith.constant 0 : index
    %7 = vector.load %arg2[%c0_7, %c0_8] : memref<32x128xf32, #tpu.memory_space<vmem>>, vector<32x128xf32>
    %c0_9 = arith.constant 0 : index
    %c0_10 = arith.constant 0 : index
    %8 = vector.load %arg4[%c0_9, %c0_10] : memref<32x128xf32, #tpu.memory_space<vmem>>, vector<32x128xf32>
    %c0_11 = arith.constant 0 : index
    %c0_12 = arith.constant 0 : index
    %9 = vector.load %arg5[%c0_11, %c0_12] : memref<32x128xf32, #tpu.memory_space<vmem>>, vector<32x128xf32>
    %c0_13 = arith.constant 0 : index
    %c0_14 = arith.constant 0 : index
    %10 = vector.load %arg6[%c0_13, %c0_14] : memref<1x128xf32, #tpu.memory_space<vmem>>, vector<1x128xf32>
    %cst_15 = arith.constant 0.000000e+00 : f32
    %11 = vector.broadcast %cst_15 : f32 to vector<8x32xf32>
    %c0_i32 = arith.constant 0 : i32
    %c8_i32 = arith.constant 8 : i32
    %12 = arith.muli %c0_i32, %c8_i32 : i32
    %13 = tpu.assume_multiple %12, 8 : i32
    %14 = arith.index_cast %13 : i32 to index
    %c0_16 = arith.constant 0 : index
    %15 = vector.load %arg10[%14, %c0_16] : memref<64x128xf32, #tpu.memory_space<vmem>>, vector<8x128xf32>
    %cst_17 = arith.constant dense<0.000000e+00> : vector<8x128xf32>
    %16 = tpu.matmul %11, %7, %cst_17 {dimension_numbers = #tpu.dot_dimension_numbers<[1], [0], [0], [1], [0, 0, 1, 1], [], []>} : vector<8x32xf32>, vector<32x128xf32>, vector<8x128xf32> -> vector<8x128xf32>
    %17 = arith.addf %15, %16 : vector<8x128xf32>
    %18 = arith.negf %17 : vector<8x128xf32>
    %19 = math.exp %18 : vector<8x128xf32>
    %cst_18 = arith.constant 1.000000e+00 : f32
    %20 = vector.broadcast %cst_18 : f32 to vector<8x128xf32>
    %21 = arith.addf %20, %19 : vector<8x128xf32>
    %22 = arith.divf %20, %21 : vector<8x128xf32>
    %23 = vector.extract_strided_slice %22 {offsets = [0, 0], sizes = [8, 32], strides = [1, 1]} : vector<8x128xf32> to vector<8x32xf32>
    %24 = vector.extract_strided_slice %22 {offsets = [0, 32], sizes = [8, 32], strides = [1, 1]} : vector<8x128xf32> to vector<8x32xf32>
    %25 = vector.extract_strided_slice %22 {offsets = [0, 64], sizes = [8, 32], strides = [1, 1]} : vector<8x128xf32> to vector<8x32xf32>
    %cst_19 = arith.constant 2.000000e+00 : f32
    %26 = vector.broadcast %cst_19 : f32 to vector<8x32xf32>
    %27 = arith.mulf %26, %25 : vector<8x32xf32>
    %cst_20 = arith.constant 1.000000e+00 : f32
    %28 = vector.broadcast %cst_20 : f32 to vector<8x32xf32>
    %29 = arith.subf %27, %28 : vector<8x32xf32>
    %30 = vector.extract_strided_slice %22 {offsets = [0, 96], sizes = [8, 32], strides = [1, 1]} : vector<8x128xf32> to vector<8x32xf32>
    %31 = arith.mulf %24, %11 : vector<8x32xf32>
    %32 = arith.mulf %23, %29 : vector<8x32xf32>
    %33 = arith.addf %31, %32 : vector<8x32xf32>
    %34 = math.tanh %33 : vector<8x32xf32>
    %35 = arith.mulf %30, %34 : vector<8x32xf32>
    %cst_21 = arith.constant dense<0.000000e+00> : vector<8x128xf32>
    %36 = tpu.matmul %35, %8, %cst_21 {dimension_numbers = #tpu.dot_dimension_numbers<[1], [0], [0], [1], [0, 0, 1, 1], [], []>} : vector<8x32xf32>, vector<32x128xf32>, vector<8x128xf32> -> vector<8x128xf32>
    %cst_22 = arith.constant dense<0.000000e+00> : vector<8x128xf32>
    %37 = tpu.matmul %11, %9, %cst_22 {dimension_numbers = #tpu.dot_dimension_numbers<[1], [0], [0], [1], [0, 0, 1, 1], [], []>} : vector<8x32xf32>, vector<32x128xf32>, vector<8x128xf32> -> vector<8x128xf32>
    %38 = arith.addf %36, %37 : vector<8x128xf32>
    %39 = vector.broadcast %10 : vector<1x128xf32> to vector<8x128xf32>
    %40 = arith.addf %38, %39 : vector<8x128xf32>
    %41 = arith.negf %40 : vector<8x128xf32>
    %42 = math.exp %41 : vector<8x128xf32>
    %cst_23 = arith.constant 1.000000e+00 : f32
    %43 = vector.broadcast %cst_23 : f32 to vector<8x128xf32>
    %44 = arith.addf %43, %42 : vector<8x128xf32>
    %45 = arith.divf %43, %44 : vector<8x128xf32>
    %46 = vector.extract_strided_slice %45 {offsets = [0, 0], sizes = [8, 32], strides = [1, 1]} : vector<8x128xf32> to vector<8x32xf32>
    %47 = vector.extract_strided_slice %45 {offsets = [0, 32], sizes = [8, 32], strides = [1, 1]} : vector<8x128xf32> to vector<8x32xf32>
    %48 = vector.extract_strided_slice %45 {offsets = [0, 64], sizes = [8, 32], strides = [1, 1]} : vector<8x128xf32> to vector<8x32xf32>
    %cst_24 = arith.constant 2.000000e+00 : f32
    %49 = vector.broadcast %cst_24 : f32 to vector<8x32xf32>
    %50 = arith.mulf %49, %48 : vector<8x32xf32>
    %cst_25 = arith.constant 1.000000e+00 : f32
    %51 = vector.broadcast %cst_25 : f32 to vector<8x32xf32>
    %52 = arith.subf %50, %51 : vector<8x32xf32>
    %53 = vector.extract_strided_slice %45 {offsets = [0, 96], sizes = [8, 32], strides = [1, 1]} : vector<8x128xf32> to vector<8x32xf32>
    %54 = arith.mulf %47, %11 : vector<8x32xf32>
    %55 = arith.mulf %46, %52 : vector<8x32xf32>
    %56 = arith.addf %54, %55 : vector<8x32xf32>
    %57 = math.tanh %56 : vector<8x32xf32>
    %58 = arith.mulf %53, %57 : vector<8x32xf32>
    %c1_i32 = arith.constant 1 : i32
    %c8_i32_26 = arith.constant 8 : i32
    %59 = arith.muli %c1_i32, %c8_i32_26 : i32
    %60 = tpu.assume_multiple %59, 8 : i32
    %61 = arith.index_cast %60 : i32 to index
    %c0_27 = arith.constant 0 : index
    %62 = vector.load %arg10[%61, %c0_27] : memref<64x128xf32, #tpu.memory_space<vmem>>, vector<8x128xf32>
    %cst_28 = arith.constant dense<0.000000e+00> : vector<8x128xf32>
    %63 = tpu.matmul %35, %7, %cst_28 {dimension_numbers = #tpu.dot_dimension_numbers<[1], [0], [0], [1], [0, 0, 1, 1], [], []>} : vector<8x32xf32>, vector<32x128xf32>, vector<8x128xf32> -> vector<8x128xf32>
    %64 = arith.addf %62, %63 : vector<8x128xf32>
    %65 = arith.negf %64 : vector<8x128xf32>
    %66 = math.exp %65 : vector<8x128xf32>
    %cst_29 = arith.constant 1.000000e+00 : f32
    %67 = vector.broadcast %cst_29 : f32 to vector<8x128xf32>
    %68 = arith.addf %67, %66 : vector<8x128xf32>
    %69 = arith.divf %67, %68 : vector<8x128xf32>
    %70 = vector.extract_strided_slice %69 {offsets = [0, 0], sizes = [8, 32], strides = [1, 1]} : vector<8x128xf32> to vector<8x32xf32>
    %71 = vector.extract_strided_slice %69 {offsets = [0, 32], sizes = [8, 32], strides = [1, 1]} : vector<8x128xf32> to vector<8x32xf32>
    %72 = vector.extract_strided_slice %69 {offsets = [0, 64], sizes = [8, 32], strides = [1, 1]} : vector<8x128xf32> to vector<8x32xf32>
    %cst_30 = arith.constant 2.000000e+00 : f32
    %73 = vector.broadcast %cst_30 : f32 to vector<8x32xf32>
    %74 = arith.mulf %73, %72 : vector<8x32xf32>
    %cst_31 = arith.constant 1.000000e+00 : f32
    %75 = vector.broadcast %cst_31 : f32 to vector<8x32xf32>
    %76 = arith.subf %74, %75 : vector<8x32xf32>
    %77 = vector.extract_strided_slice %69 {offsets = [0, 96], sizes = [8, 32], strides = [1, 1]} : vector<8x128xf32> to vector<8x32xf32>
    %78 = arith.mulf %71, %33 : vector<8x32xf32>
    %79 = arith.mulf %70, %76 : vector<8x32xf32>
    %80 = arith.addf %78, %79 : vector<8x32xf32>
    %81 = math.tanh %80 : vector<8x32xf32>
    %82 = arith.mulf %77, %81 : vector<8x32xf32>
    %cst_32 = arith.constant dense<0.000000e+00> : vector<8x128xf32>
    %83 = tpu.matmul %82, %8, %cst_32 {dimension_numbers = #tpu.dot_dimension_numbers<[1], [0], [0], [1], [0, 0, 1, 1], [], []>} : vector<8x32xf32>, vector<32x128xf32>, vector<8x128xf32> -> vector<8x128xf32>
    %cst_33 = arith.constant dense<0.000000e+00> : vector<8x128xf32>
    %84 = tpu.matmul %58, %9, %cst_33 {dimension_numbers = #tpu.dot_dimension_numbers<[1], [0], [0], [1], [0, 0, 1, 1], [], []>} : vector<8x32xf32>, vector<32x128xf32>, vector<8x128xf32> -> vector<8x128xf32>
    %85 = arith.addf %83, %84 : vector<8x128xf32>
    %86 = vector.broadcast %10 : vector<1x128xf32> to vector<8x128xf32>
    %87 = arith.addf %85, %86 : vector<8x128xf32>
    %88 = arith.negf %87 : vector<8x128xf32>
    %89 = math.exp %88 : vector<8x128xf32>
    %cst_34 = arith.constant 1.000000e+00 : f32
    %90 = vector.broadcast %cst_34 : f32 to vector<8x128xf32>
    %91 = arith.addf %90, %89 : vector<8x128xf32>
    %92 = arith.divf %90, %91 : vector<8x128xf32>
    %93 = vector.extract_strided_slice %92 {offsets = [0, 0], sizes = [8, 32], strides = [1, 1]} : vector<8x128xf32> to vector<8x32xf32>
    %94 = vector.extract_strided_slice %92 {offsets = [0, 32], sizes = [8, 32], strides = [1, 1]} : vector<8x128xf32> to vector<8x32xf32>
    %95 = vector.extract_strided_slice %92 {offsets = [0, 64], sizes = [8, 32], strides = [1, 1]} : vector<8x128xf32> to vector<8x32xf32>
    %cst_35 = arith.constant 2.000000e+00 : f32
    %96 = vector.broadcast %cst_35 : f32 to vector<8x32xf32>
    %97 = arith.mulf %96, %95 : vector<8x32xf32>
    %cst_36 = arith.constant 1.000000e+00 : f32
    %98 = vector.broadcast %cst_36 : f32 to vector<8x32xf32>
    %99 = arith.subf %97, %98 : vector<8x32xf32>
    %100 = vector.extract_strided_slice %92 {offsets = [0, 96], sizes = [8, 32], strides = [1, 1]} : vector<8x128xf32> to vector<8x32xf32>
    %101 = arith.mulf %94, %56 : vector<8x32xf32>
    %102 = arith.mulf %93, %99 : vector<8x32xf32>
    %103 = arith.addf %101, %102 : vector<8x32xf32>
    %104 = math.tanh %103 : vector<8x32xf32>
    %105 = arith.mulf %100, %104 : vector<8x32xf32>
    %c2_i32 = arith.constant 2 : i32
    %c8_i32_37 = arith.constant 8 : i32
    %106 = arith.muli %c2_i32, %c8_i32_37 : i32
    %107 = tpu.assume_multiple %106, 8 : i32
    %108 = arith.index_cast %107 : i32 to index
    %c0_38 = arith.constant 0 : index
    %109 = vector.load %arg10[%108, %c0_38] : memref<64x128xf32, #tpu.memory_space<vmem>>, vector<8x128xf32>
    %cst_39 = arith.constant dense<0.000000e+00> : vector<8x128xf32>
    %110 = tpu.matmul %82, %7, %cst_39 {dimension_numbers = #tpu.dot_dimension_numbers<[1], [0], [0], [1], [0, 0, 1, 1], [], []>} : vector<8x32xf32>, vector<32x128xf32>, vector<8x128xf32> -> vector<8x128xf32>
    %111 = arith.addf %109, %110 : vector<8x128xf32>
    %112 = arith.negf %111 : vector<8x128xf32>
    %113 = math.exp %112 : vector<8x128xf32>
    %cst_40 = arith.constant 1.000000e+00 : f32
    %114 = vector.broadcast %cst_40 : f32 to vector<8x128xf32>
    %115 = arith.addf %114, %113 : vector<8x128xf32>
    %116 = arith.divf %114, %115 : vector<8x128xf32>
    %117 = vector.extract_strided_slice %116 {offsets = [0, 0], sizes = [8, 32], strides = [1, 1]} : vector<8x128xf32> to vector<8x32xf32>
    %118 = vector.extract_strided_slice %116 {offsets = [0, 32], sizes = [8, 32], strides = [1, 1]} : vector<8x128xf32> to vector<8x32xf32>
    %119 = vector.extract_strided_slice %116 {offsets = [0, 64], sizes = [8, 32], strides = [1, 1]} : vector<8x128xf32> to vector<8x32xf32>
    %cst_41 = arith.constant 2.000000e+00 : f32
    %120 = vector.broadcast %cst_41 : f32 to vector<8x32xf32>
    %121 = arith.mulf %120, %119 : vector<8x32xf32>
    %cst_42 = arith.constant 1.000000e+00 : f32
    %122 = vector.broadcast %cst_42 : f32 to vector<8x32xf32>
    %123 = arith.subf %121, %122 : vector<8x32xf32>
    %124 = vector.extract_strided_slice %116 {offsets = [0, 96], sizes = [8, 32], strides = [1, 1]} : vector<8x128xf32> to vector<8x32xf32>
    %125 = arith.mulf %118, %80 : vector<8x32xf32>
    %126 = arith.mulf %117, %123 : vector<8x32xf32>
    %127 = arith.addf %125, %126 : vector<8x32xf32>
    %128 = math.tanh %127 : vector<8x32xf32>
    %129 = arith.mulf %124, %128 : vector<8x32xf32>
    %cst_43 = arith.constant dense<0.000000e+00> : vector<8x128xf32>
    %130 = tpu.matmul %129, %8, %cst_43 {dimension_numbers = #tpu.dot_dimension_numbers<[1], [0], [0], [1], [0, 0, 1, 1], [], []>} : vector<8x32xf32>, vector<32x128xf32>, vector<8x128xf32> -> vector<8x128xf32>
    %cst_44 = arith.constant dense<0.000000e+00> : vector<8x128xf32>
    %131 = tpu.matmul %105, %9, %cst_44 {dimension_numbers = #tpu.dot_dimension_numbers<[1], [0], [0], [1], [0, 0, 1, 1], [], []>} : vector<8x32xf32>, vector<32x128xf32>, vector<8x128xf32> -> vector<8x128xf32>
    %132 = arith.addf %130, %131 : vector<8x128xf32>
    %133 = vector.broadcast %10 : vector<1x128xf32> to vector<8x128xf32>
    %134 = arith.addf %132, %133 : vector<8x128xf32>
    %135 = arith.negf %134 : vector<8x128xf32>
    %136 = math.exp %135 : vector<8x128xf32>
    %cst_45 = arith.constant 1.000000e+00 : f32
    %137 = vector.broadcast %cst_45 : f32 to vector<8x128xf32>
    %138 = arith.addf %137, %136 : vector<8x128xf32>
    %139 = arith.divf %137, %138 : vector<8x128xf32>
    %140 = vector.extract_strided_slice %139 {offsets = [0, 0], sizes = [8, 32], strides = [1, 1]} : vector<8x128xf32> to vector<8x32xf32>
    %141 = vector.extract_strided_slice %139 {offsets = [0, 32], sizes = [8, 32], strides = [1, 1]} : vector<8x128xf32> to vector<8x32xf32>
    %142 = vector.extract_strided_slice %139 {offsets = [0, 64], sizes = [8, 32], strides = [1, 1]} : vector<8x128xf32> to vector<8x32xf32>
    %cst_46 = arith.constant 2.000000e+00 : f32
    %143 = vector.broadcast %cst_46 : f32 to vector<8x32xf32>
    %144 = arith.mulf %143, %142 : vector<8x32xf32>
    %cst_47 = arith.constant 1.000000e+00 : f32
    %145 = vector.broadcast %cst_47 : f32 to vector<8x32xf32>
    %146 = arith.subf %144, %145 : vector<8x32xf32>
    %147 = vector.extract_strided_slice %139 {offsets = [0, 96], sizes = [8, 32], strides = [1, 1]} : vector<8x128xf32> to vector<8x32xf32>
    %148 = arith.mulf %141, %103 : vector<8x32xf32>
    %149 = arith.mulf %140, %146 : vector<8x32xf32>
    %150 = arith.addf %148, %149 : vector<8x32xf32>
    %151 = math.tanh %150 : vector<8x32xf32>
    %152 = arith.mulf %147, %151 : vector<8x32xf32>
    %c3_i32 = arith.constant 3 : i32
    %c8_i32_48 = arith.constant 8 : i32
    %153 = arith.muli %c3_i32, %c8_i32_48 : i32
    %154 = tpu.assume_multiple %153, 8 : i32
    %155 = arith.index_cast %154 : i32 to index
    %c0_49 = arith.constant 0 : index
    %156 = vector.load %arg10[%155, %c0_49] : memref<64x128xf32, #tpu.memory_space<vmem>>, vector<8x128xf32>
    %cst_50 = arith.constant dense<0.000000e+00> : vector<8x128xf32>
    %157 = tpu.matmul %129, %7, %cst_50 {dimension_numbers = #tpu.dot_dimension_numbers<[1], [0], [0], [1], [0, 0, 1, 1], [], []>} : vector<8x32xf32>, vector<32x128xf32>, vector<8x128xf32> -> vector<8x128xf32>
    %158 = arith.addf %156, %157 : vector<8x128xf32>
    %159 = arith.negf %158 : vector<8x128xf32>
    %160 = math.exp %159 : vector<8x128xf32>
    %cst_51 = arith.constant 1.000000e+00 : f32
    %161 = vector.broadcast %cst_51 : f32 to vector<8x128xf32>
    %162 = arith.addf %161, %160 : vector<8x128xf32>
    %163 = arith.divf %161, %162 : vector<8x128xf32>
    %164 = vector.extract_strided_slice %163 {offsets = [0, 0], sizes = [8, 32], strides = [1, 1]} : vector<8x128xf32> to vector<8x32xf32>
    %165 = vector.extract_strided_slice %163 {offsets = [0, 32], sizes = [8, 32], strides = [1, 1]} : vector<8x128xf32> to vector<8x32xf32>
    %166 = vector.extract_strided_slice %163 {offsets = [0, 64], sizes = [8, 32], strides = [1, 1]} : vector<8x128xf32> to vector<8x32xf32>
    %cst_52 = arith.constant 2.000000e+00 : f32
    %167 = vector.broadcast %cst_52 : f32 to vector<8x32xf32>
    %168 = arith.mulf %167, %166 : vector<8x32xf32>
    %cst_53 = arith.constant 1.000000e+00 : f32
    %169 = vector.broadcast %cst_53 : f32 to vector<8x32xf32>
    %170 = arith.subf %168, %169 : vector<8x32xf32>
    %171 = vector.extract_strided_slice %163 {offsets = [0, 96], sizes = [8, 32], strides = [1, 1]} : vector<8x128xf32> to vector<8x32xf32>
    %172 = arith.mulf %165, %127 : vector<8x32xf32>
    %173 = arith.mulf %164, %170 : vector<8x32xf32>
    %174 = arith.addf %172, %173 : vector<8x32xf32>
    %175 = math.tanh %174 : vector<8x32xf32>
    %176 = arith.mulf %171, %175 : vector<8x32xf32>
    %cst_54 = arith.constant dense<0.000000e+00> : vector<8x128xf32>
    %177 = tpu.matmul %176, %8, %cst_54 {dimension_numbers = #tpu.dot_dimension_numbers<[1], [0], [0], [1], [0, 0, 1, 1], [], []>} : vector<8x32xf32>, vector<32x128xf32>, vector<8x128xf32> -> vector<8x128xf32>
    %cst_55 = arith.constant dense<0.000000e+00> : vector<8x128xf32>
    %178 = tpu.matmul %152, %9, %cst_55 {dimension_numbers = #tpu.dot_dimension_numbers<[1], [0], [0], [1], [0, 0, 1, 1], [], []>} : vector<8x32xf32>, vector<32x128xf32>, vector<8x128xf32> -> vector<8x128xf32>
    %179 = arith.addf %177, %178 : vector<8x128xf32>
    %180 = vector.broadcast %10 : vector<1x128xf32> to vector<8x128xf32>
    %181 = arith.addf %179, %180 : vector<8x128xf32>
    %182 = arith.negf %181 : vector<8x128xf32>
    %183 = math.exp %182 : vector<8x128xf32>
    %cst_56 = arith.constant 1.000000e+00 : f32
    %184 = vector.broadcast %cst_56 : f32 to vector<8x128xf32>
    %185 = arith.addf %184, %183 : vector<8x128xf32>
    %186 = arith.divf %184, %185 : vector<8x128xf32>
    %187 = vector.extract_strided_slice %186 {offsets = [0, 0], sizes = [8, 32], strides = [1, 1]} : vector<8x128xf32> to vector<8x32xf32>
    %188 = vector.extract_strided_slice %186 {offsets = [0, 32], sizes = [8, 32], strides = [1, 1]} : vector<8x128xf32> to vector<8x32xf32>
    %189 = vector.extract_strided_slice %186 {offsets = [0, 64], sizes = [8, 32], strides = [1, 1]} : vector<8x128xf32> to vector<8x32xf32>
    %cst_57 = arith.constant 2.000000e+00 : f32
    %190 = vector.broadcast %cst_57 : f32 to vector<8x32xf32>
    %191 = arith.mulf %190, %189 : vector<8x32xf32>
    %cst_58 = arith.constant 1.000000e+00 : f32
    %192 = vector.broadcast %cst_58 : f32 to vector<8x32xf32>
    %193 = arith.subf %191, %192 : vector<8x32xf32>
    %194 = vector.extract_strided_slice %186 {offsets = [0, 96], sizes = [8, 32], strides = [1, 1]} : vector<8x128xf32> to vector<8x32xf32>
    %195 = arith.mulf %188, %150 : vector<8x32xf32>
    %196 = arith.mulf %187, %193 : vector<8x32xf32>
    %197 = arith.addf %195, %196 : vector<8x32xf32>
    %198 = math.tanh %197 : vector<8x32xf32>
    %199 = arith.mulf %194, %198 : vector<8x32xf32>
    %c4_i32 = arith.constant 4 : i32
    %c8_i32_59 = arith.constant 8 : i32
    %200 = arith.muli %c4_i32, %c8_i32_59 : i32
    %201 = tpu.assume_multiple %200, 8 : i32
    %202 = arith.index_cast %201 : i32 to index
    %c0_60 = arith.constant 0 : index
    %203 = vector.load %arg10[%202, %c0_60] : memref<64x128xf32, #tpu.memory_space<vmem>>, vector<8x128xf32>
    %cst_61 = arith.constant dense<0.000000e+00> : vector<8x128xf32>
    %204 = tpu.matmul %176, %7, %cst_61 {dimension_numbers = #tpu.dot_dimension_numbers<[1], [0], [0], [1], [0, 0, 1, 1], [], []>} : vector<8x32xf32>, vector<32x128xf32>, vector<8x128xf32> -> vector<8x128xf32>
    %205 = arith.addf %203, %204 : vector<8x128xf32>
    %206 = arith.negf %205 : vector<8x128xf32>
    %207 = math.exp %206 : vector<8x128xf32>
    %cst_62 = arith.constant 1.000000e+00 : f32
    %208 = vector.broadcast %cst_62 : f32 to vector<8x128xf32>
    %209 = arith.addf %208, %207 : vector<8x128xf32>
    %210 = arith.divf %208, %209 : vector<8x128xf32>
    %211 = vector.extract_strided_slice %210 {offsets = [0, 0], sizes = [8, 32], strides = [1, 1]} : vector<8x128xf32> to vector<8x32xf32>
    %212 = vector.extract_strided_slice %210 {offsets = [0, 32], sizes = [8, 32], strides = [1, 1]} : vector<8x128xf32> to vector<8x32xf32>
    %213 = vector.extract_strided_slice %210 {offsets = [0, 64], sizes = [8, 32], strides = [1, 1]} : vector<8x128xf32> to vector<8x32xf32>
    %cst_63 = arith.constant 2.000000e+00 : f32
    %214 = vector.broadcast %cst_63 : f32 to vector<8x32xf32>
    %215 = arith.mulf %214, %213 : vector<8x32xf32>
    %cst_64 = arith.constant 1.000000e+00 : f32
    %216 = vector.broadcast %cst_64 : f32 to vector<8x32xf32>
    %217 = arith.subf %215, %216 : vector<8x32xf32>
    %218 = vector.extract_strided_slice %210 {offsets = [0, 96], sizes = [8, 32], strides = [1, 1]} : vector<8x128xf32> to vector<8x32xf32>
    %219 = arith.mulf %212, %174 : vector<8x32xf32>
    %220 = arith.mulf %211, %217 : vector<8x32xf32>
    %221 = arith.addf %219, %220 : vector<8x32xf32>
    %222 = math.tanh %221 : vector<8x32xf32>
    %223 = arith.mulf %218, %222 : vector<8x32xf32>
    %cst_65 = arith.constant dense<0.000000e+00> : vector<8x128xf32>
    %224 = tpu.matmul %223, %8, %cst_65 {dimension_numbers = #tpu.dot_dimension_numbers<[1], [0], [0], [1], [0, 0, 1, 1], [], []>} : vector<8x32xf32>, vector<32x128xf32>, vector<8x128xf32> -> vector<8x128xf32>
    %cst_66 = arith.constant dense<0.000000e+00> : vector<8x128xf32>
    %225 = tpu.matmul %199, %9, %cst_66 {dimension_numbers = #tpu.dot_dimension_numbers<[1], [0], [0], [1], [0, 0, 1, 1], [], []>} : vector<8x32xf32>, vector<32x128xf32>, vector<8x128xf32> -> vector<8x128xf32>
    %226 = arith.addf %224, %225 : vector<8x128xf32>
    %227 = vector.broadcast %10 : vector<1x128xf32> to vector<8x128xf32>
    %228 = arith.addf %226, %227 : vector<8x128xf32>
    %229 = arith.negf %228 : vector<8x128xf32>
    %230 = math.exp %229 : vector<8x128xf32>
    %cst_67 = arith.constant 1.000000e+00 : f32
    %231 = vector.broadcast %cst_67 : f32 to vector<8x128xf32>
    %232 = arith.addf %231, %230 : vector<8x128xf32>
    %233 = arith.divf %231, %232 : vector<8x128xf32>
    %234 = vector.extract_strided_slice %233 {offsets = [0, 0], sizes = [8, 32], strides = [1, 1]} : vector<8x128xf32> to vector<8x32xf32>
    %235 = vector.extract_strided_slice %233 {offsets = [0, 32], sizes = [8, 32], strides = [1, 1]} : vector<8x128xf32> to vector<8x32xf32>
    %236 = vector.extract_strided_slice %233 {offsets = [0, 64], sizes = [8, 32], strides = [1, 1]} : vector<8x128xf32> to vector<8x32xf32>
    %cst_68 = arith.constant 2.000000e+00 : f32
    %237 = vector.broadcast %cst_68 : f32 to vector<8x32xf32>
    %238 = arith.mulf %237, %236 : vector<8x32xf32>
    %cst_69 = arith.constant 1.000000e+00 : f32
    %239 = vector.broadcast %cst_69 : f32 to vector<8x32xf32>
    %240 = arith.subf %238, %239 : vector<8x32xf32>
    %241 = vector.extract_strided_slice %233 {offsets = [0, 96], sizes = [8, 32], strides = [1, 1]} : vector<8x128xf32> to vector<8x32xf32>
    %242 = arith.mulf %235, %197 : vector<8x32xf32>
    %243 = arith.mulf %234, %240 : vector<8x32xf32>
    %244 = arith.addf %242, %243 : vector<8x32xf32>
    %245 = math.tanh %244 : vector<8x32xf32>
    %246 = arith.mulf %241, %245 : vector<8x32xf32>
    %c5_i32 = arith.constant 5 : i32
    %c8_i32_70 = arith.constant 8 : i32
    %247 = arith.muli %c5_i32, %c8_i32_70 : i32
    %248 = tpu.assume_multiple %247, 8 : i32
    %249 = arith.index_cast %248 : i32 to index
    %c0_71 = arith.constant 0 : index
    %250 = vector.load %arg10[%249, %c0_71] : memref<64x128xf32, #tpu.memory_space<vmem>>, vector<8x128xf32>
    %cst_72 = arith.constant dense<0.000000e+00> : vector<8x128xf32>
    %251 = tpu.matmul %223, %7, %cst_72 {dimension_numbers = #tpu.dot_dimension_numbers<[1], [0], [0], [1], [0, 0, 1, 1], [], []>} : vector<8x32xf32>, vector<32x128xf32>, vector<8x128xf32> -> vector<8x128xf32>
    %252 = arith.addf %250, %251 : vector<8x128xf32>
    %253 = arith.negf %252 : vector<8x128xf32>
    %254 = math.exp %253 : vector<8x128xf32>
    %cst_73 = arith.constant 1.000000e+00 : f32
    %255 = vector.broadcast %cst_73 : f32 to vector<8x128xf32>
    %256 = arith.addf %255, %254 : vector<8x128xf32>
    %257 = arith.divf %255, %256 : vector<8x128xf32>
    %258 = vector.extract_strided_slice %257 {offsets = [0, 0], sizes = [8, 32], strides = [1, 1]} : vector<8x128xf32> to vector<8x32xf32>
    %259 = vector.extract_strided_slice %257 {offsets = [0, 32], sizes = [8, 32], strides = [1, 1]} : vector<8x128xf32> to vector<8x32xf32>
    %260 = vector.extract_strided_slice %257 {offsets = [0, 64], sizes = [8, 32], strides = [1, 1]} : vector<8x128xf32> to vector<8x32xf32>
    %cst_74 = arith.constant 2.000000e+00 : f32
    %261 = vector.broadcast %cst_74 : f32 to vector<8x32xf32>
    %262 = arith.mulf %261, %260 : vector<8x32xf32>
    %cst_75 = arith.constant 1.000000e+00 : f32
    %263 = vector.broadcast %cst_75 : f32 to vector<8x32xf32>
    %264 = arith.subf %262, %263 : vector<8x32xf32>
    %265 = vector.extract_strided_slice %257 {offsets = [0, 96], sizes = [8, 32], strides = [1, 1]} : vector<8x128xf32> to vector<8x32xf32>
    %266 = arith.mulf %259, %221 : vector<8x32xf32>
    %267 = arith.mulf %258, %264 : vector<8x32xf32>
    %268 = arith.addf %266, %267 : vector<8x32xf32>
    %269 = math.tanh %268 : vector<8x32xf32>
    %270 = arith.mulf %265, %269 : vector<8x32xf32>
    %cst_76 = arith.constant dense<0.000000e+00> : vector<8x128xf32>
    %271 = tpu.matmul %270, %8, %cst_76 {dimension_numbers = #tpu.dot_dimension_numbers<[1], [0], [0], [1], [0, 0, 1, 1], [], []>} : vector<8x32xf32>, vector<32x128xf32>, vector<8x128xf32> -> vector<8x128xf32>
    %cst_77 = arith.constant dense<0.000000e+00> : vector<8x128xf32>
    %272 = tpu.matmul %246, %9, %cst_77 {dimension_numbers = #tpu.dot_dimension_numbers<[1], [0], [0], [1], [0, 0, 1, 1], [], []>} : vector<8x32xf32>, vector<32x128xf32>, vector<8x128xf32> -> vector<8x128xf32>
    %273 = arith.addf %271, %272 : vector<8x128xf32>
    %274 = vector.broadcast %10 : vector<1x128xf32> to vector<8x128xf32>
    %275 = arith.addf %273, %274 : vector<8x128xf32>
    %276 = arith.negf %275 : vector<8x128xf32>
    %277 = math.exp %276 : vector<8x128xf32>
    %cst_78 = arith.constant 1.000000e+00 : f32
    %278 = vector.broadcast %cst_78 : f32 to vector<8x128xf32>
    %279 = arith.addf %278, %277 : vector<8x128xf32>
    %280 = arith.divf %278, %279 : vector<8x128xf32>
    %281 = vector.extract_strided_slice %280 {offsets = [0, 0], sizes = [8, 32], strides = [1, 1]} : vector<8x128xf32> to vector<8x32xf32>
    %282 = vector.extract_strided_slice %280 {offsets = [0, 32], sizes = [8, 32], strides = [1, 1]} : vector<8x128xf32> to vector<8x32xf32>
    %283 = vector.extract_strided_slice %280 {offsets = [0, 64], sizes = [8, 32], strides = [1, 1]} : vector<8x128xf32> to vector<8x32xf32>
    %cst_79 = arith.constant 2.000000e+00 : f32
    %284 = vector.broadcast %cst_79 : f32 to vector<8x32xf32>
    %285 = arith.mulf %284, %283 : vector<8x32xf32>
    %cst_80 = arith.constant 1.000000e+00 : f32
    %286 = vector.broadcast %cst_80 : f32 to vector<8x32xf32>
    %287 = arith.subf %285, %286 : vector<8x32xf32>
    %288 = vector.extract_strided_slice %280 {offsets = [0, 96], sizes = [8, 32], strides = [1, 1]} : vector<8x128xf32> to vector<8x32xf32>
    %289 = arith.mulf %282, %244 : vector<8x32xf32>
    %290 = arith.mulf %281, %287 : vector<8x32xf32>
    %291 = arith.addf %289, %290 : vector<8x32xf32>
    %292 = math.tanh %291 : vector<8x32xf32>
    %293 = arith.mulf %288, %292 : vector<8x32xf32>
    %c6_i32 = arith.constant 6 : i32
    %c8_i32_81 = arith.constant 8 : i32
    %294 = arith.muli %c6_i32, %c8_i32_81 : i32
    %295 = tpu.assume_multiple %294, 8 : i32
    %296 = arith.index_cast %295 : i32 to index
    %c0_82 = arith.constant 0 : index
    %297 = vector.load %arg10[%296, %c0_82] : memref<64x128xf32, #tpu.memory_space<vmem>>, vector<8x128xf32>
    %cst_83 = arith.constant dense<0.000000e+00> : vector<8x128xf32>
    %298 = tpu.matmul %270, %7, %cst_83 {dimension_numbers = #tpu.dot_dimension_numbers<[1], [0], [0], [1], [0, 0, 1, 1], [], []>} : vector<8x32xf32>, vector<32x128xf32>, vector<8x128xf32> -> vector<8x128xf32>
    %299 = arith.addf %297, %298 : vector<8x128xf32>
    %300 = arith.negf %299 : vector<8x128xf32>
    %301 = math.exp %300 : vector<8x128xf32>
    %cst_84 = arith.constant 1.000000e+00 : f32
    %302 = vector.broadcast %cst_84 : f32 to vector<8x128xf32>
    %303 = arith.addf %302, %301 : vector<8x128xf32>
    %304 = arith.divf %302, %303 : vector<8x128xf32>
    %305 = vector.extract_strided_slice %304 {offsets = [0, 0], sizes = [8, 32], strides = [1, 1]} : vector<8x128xf32> to vector<8x32xf32>
    %306 = vector.extract_strided_slice %304 {offsets = [0, 32], sizes = [8, 32], strides = [1, 1]} : vector<8x128xf32> to vector<8x32xf32>
    %307 = vector.extract_strided_slice %304 {offsets = [0, 64], sizes = [8, 32], strides = [1, 1]} : vector<8x128xf32> to vector<8x32xf32>
    %cst_85 = arith.constant 2.000000e+00 : f32
    %308 = vector.broadcast %cst_85 : f32 to vector<8x32xf32>
    %309 = arith.mulf %308, %307 : vector<8x32xf32>
    %cst_86 = arith.constant 1.000000e+00 : f32
    %310 = vector.broadcast %cst_86 : f32 to vector<8x32xf32>
    %311 = arith.subf %309, %310 : vector<8x32xf32>
    %312 = vector.extract_strided_slice %304 {offsets = [0, 96], sizes = [8, 32], strides = [1, 1]} : vector<8x128xf32> to vector<8x32xf32>
    %313 = arith.mulf %306, %268 : vector<8x32xf32>
    %314 = arith.mulf %305, %311 : vector<8x32xf32>
    %315 = arith.addf %313, %314 : vector<8x32xf32>
    %316 = math.tanh %315 : vector<8x32xf32>
    %317 = arith.mulf %312, %316 : vector<8x32xf32>
    %cst_87 = arith.constant dense<0.000000e+00> : vector<8x128xf32>
    %318 = tpu.matmul %317, %8, %cst_87 {dimension_numbers = #tpu.dot_dimension_numbers<[1], [0], [0], [1], [0, 0, 1, 1], [], []>} : vector<8x32xf32>, vector<32x128xf32>, vector<8x128xf32> -> vector<8x128xf32>
    %cst_88 = arith.constant dense<0.000000e+00> : vector<8x128xf32>
    %319 = tpu.matmul %293, %9, %cst_88 {dimension_numbers = #tpu.dot_dimension_numbers<[1], [0], [0], [1], [0, 0, 1, 1], [], []>} : vector<8x32xf32>, vector<32x128xf32>, vector<8x128xf32> -> vector<8x128xf32>
    %320 = arith.addf %318, %319 : vector<8x128xf32>
    %321 = vector.broadcast %10 : vector<1x128xf32> to vector<8x128xf32>
    %322 = arith.addf %320, %321 : vector<8x128xf32>
    %323 = arith.negf %322 : vector<8x128xf32>
    %324 = math.exp %323 : vector<8x128xf32>
    %cst_89 = arith.constant 1.000000e+00 : f32
    %325 = vector.broadcast %cst_89 : f32 to vector<8x128xf32>
    %326 = arith.addf %325, %324 : vector<8x128xf32>
    %327 = arith.divf %325, %326 : vector<8x128xf32>
    %328 = vector.extract_strided_slice %327 {offsets = [0, 0], sizes = [8, 32], strides = [1, 1]} : vector<8x128xf32> to vector<8x32xf32>
    %329 = vector.extract_strided_slice %327 {offsets = [0, 32], sizes = [8, 32], strides = [1, 1]} : vector<8x128xf32> to vector<8x32xf32>
    %330 = vector.extract_strided_slice %327 {offsets = [0, 64], sizes = [8, 32], strides = [1, 1]} : vector<8x128xf32> to vector<8x32xf32>
    %cst_90 = arith.constant 2.000000e+00 : f32
    %331 = vector.broadcast %cst_90 : f32 to vector<8x32xf32>
    %332 = arith.mulf %331, %330 : vector<8x32xf32>
    %cst_91 = arith.constant 1.000000e+00 : f32
    %333 = vector.broadcast %cst_91 : f32 to vector<8x32xf32>
    %334 = arith.subf %332, %333 : vector<8x32xf32>
    %335 = vector.extract_strided_slice %327 {offsets = [0, 96], sizes = [8, 32], strides = [1, 1]} : vector<8x128xf32> to vector<8x32xf32>
    %336 = arith.mulf %329, %291 : vector<8x32xf32>
    %337 = arith.mulf %328, %334 : vector<8x32xf32>
    %338 = arith.addf %336, %337 : vector<8x32xf32>
    %339 = math.tanh %338 : vector<8x32xf32>
    %340 = arith.mulf %335, %339 : vector<8x32xf32>
    %c7_i32 = arith.constant 7 : i32
    %c8_i32_92 = arith.constant 8 : i32
    %341 = arith.muli %c7_i32, %c8_i32_92 : i32
    %342 = tpu.assume_multiple %341, 8 : i32
    %343 = arith.index_cast %342 : i32 to index
    %c0_93 = arith.constant 0 : index
    %344 = vector.load %arg10[%343, %c0_93] : memref<64x128xf32, #tpu.memory_space<vmem>>, vector<8x128xf32>
    %cst_94 = arith.constant dense<0.000000e+00> : vector<8x128xf32>
    %345 = tpu.matmul %317, %7, %cst_94 {dimension_numbers = #tpu.dot_dimension_numbers<[1], [0], [0], [1], [0, 0, 1, 1], [], []>} : vector<8x32xf32>, vector<32x128xf32>, vector<8x128xf32> -> vector<8x128xf32>
    %346 = arith.addf %344, %345 : vector<8x128xf32>
    %347 = arith.negf %346 : vector<8x128xf32>
    %348 = math.exp %347 : vector<8x128xf32>
    %cst_95 = arith.constant 1.000000e+00 : f32
    %349 = vector.broadcast %cst_95 : f32 to vector<8x128xf32>
    %350 = arith.addf %349, %348 : vector<8x128xf32>
    %351 = arith.divf %349, %350 : vector<8x128xf32>
    %352 = vector.extract_strided_slice %351 {offsets = [0, 0], sizes = [8, 32], strides = [1, 1]} : vector<8x128xf32> to vector<8x32xf32>
    %353 = vector.extract_strided_slice %351 {offsets = [0, 32], sizes = [8, 32], strides = [1, 1]} : vector<8x128xf32> to vector<8x32xf32>
    %354 = vector.extract_strided_slice %351 {offsets = [0, 64], sizes = [8, 32], strides = [1, 1]} : vector<8x128xf32> to vector<8x32xf32>
    %cst_96 = arith.constant 2.000000e+00 : f32
    %355 = vector.broadcast %cst_96 : f32 to vector<8x32xf32>
    %356 = arith.mulf %355, %354 : vector<8x32xf32>
    %cst_97 = arith.constant 1.000000e+00 : f32
    %357 = vector.broadcast %cst_97 : f32 to vector<8x32xf32>
    %358 = arith.subf %356, %357 : vector<8x32xf32>
    %359 = vector.extract_strided_slice %351 {offsets = [0, 96], sizes = [8, 32], strides = [1, 1]} : vector<8x128xf32> to vector<8x32xf32>
    %360 = arith.mulf %353, %315 : vector<8x32xf32>
    %361 = arith.mulf %352, %358 : vector<8x32xf32>
    %362 = arith.addf %360, %361 : vector<8x32xf32>
    %363 = math.tanh %362 : vector<8x32xf32>
    %364 = arith.mulf %359, %363 : vector<8x32xf32>
    %cst_98 = arith.constant dense<0.000000e+00> : vector<8x128xf32>
    %365 = tpu.matmul %364, %8, %cst_98 {dimension_numbers = #tpu.dot_dimension_numbers<[1], [0], [0], [1], [0, 0, 1, 1], [], []>} : vector<8x32xf32>, vector<32x128xf32>, vector<8x128xf32> -> vector<8x128xf32>
    %cst_99 = arith.constant dense<0.000000e+00> : vector<8x128xf32>
    %366 = tpu.matmul %340, %9, %cst_99 {dimension_numbers = #tpu.dot_dimension_numbers<[1], [0], [0], [1], [0, 0, 1, 1], [], []>} : vector<8x32xf32>, vector<32x128xf32>, vector<8x128xf32> -> vector<8x128xf32>
    %367 = arith.addf %365, %366 : vector<8x128xf32>
    %368 = vector.broadcast %10 : vector<1x128xf32> to vector<8x128xf32>
    %369 = arith.addf %367, %368 : vector<8x128xf32>
    %370 = arith.negf %369 : vector<8x128xf32>
    %371 = math.exp %370 : vector<8x128xf32>
    %cst_100 = arith.constant 1.000000e+00 : f32
    %372 = vector.broadcast %cst_100 : f32 to vector<8x128xf32>
    %373 = arith.addf %372, %371 : vector<8x128xf32>
    %374 = arith.divf %372, %373 : vector<8x128xf32>
    %375 = vector.extract_strided_slice %374 {offsets = [0, 0], sizes = [8, 32], strides = [1, 1]} : vector<8x128xf32> to vector<8x32xf32>
    %376 = vector.extract_strided_slice %374 {offsets = [0, 32], sizes = [8, 32], strides = [1, 1]} : vector<8x128xf32> to vector<8x32xf32>
    %377 = vector.extract_strided_slice %374 {offsets = [0, 64], sizes = [8, 32], strides = [1, 1]} : vector<8x128xf32> to vector<8x32xf32>
    %cst_101 = arith.constant 2.000000e+00 : f32
    %378 = vector.broadcast %cst_101 : f32 to vector<8x32xf32>
    %379 = arith.mulf %378, %377 : vector<8x32xf32>
    %cst_102 = arith.constant 1.000000e+00 : f32
    %380 = vector.broadcast %cst_102 : f32 to vector<8x32xf32>
    %381 = arith.subf %379, %380 : vector<8x32xf32>
    %382 = vector.extract_strided_slice %374 {offsets = [0, 96], sizes = [8, 32], strides = [1, 1]} : vector<8x128xf32> to vector<8x32xf32>
    %383 = arith.mulf %376, %338 : vector<8x32xf32>
    %384 = arith.mulf %375, %381 : vector<8x32xf32>
    %385 = arith.addf %383, %384 : vector<8x32xf32>
    %386 = math.tanh %385 : vector<8x32xf32>
    %387 = arith.mulf %382, %386 : vector<8x32xf32>
    %c8_i32_103 = arith.constant 8 : i32
    %c0_104 = arith.constant 0 : index
    %c0_105 = arith.constant 0 : index
    %388 = vector.load %arg7[%c0_104, %c0_105] : memref<32x128xf32, #tpu.memory_space<vmem>>, vector<32x128xf32>
    %cst_106 = arith.constant dense<0.000000e+00> : vector<8x128xf32>
    %389 = tpu.matmul %387, %388, %cst_106 {dimension_numbers = #tpu.dot_dimension_numbers<[1], [0], [0], [1], [0, 0, 1, 1], [], []>} : vector<8x32xf32>, vector<32x128xf32>, vector<8x128xf32> -> vector<8x128xf32>
    %c0_107 = arith.constant 0 : index
    %c0_108 = arith.constant 0 : index
    %390 = vector.load %arg8[%c0_107, %c0_108] : memref<1x128xf32, #tpu.memory_space<vmem>>, vector<1x128xf32>
    %391 = vector.broadcast %390 : vector<1x128xf32> to vector<8x128xf32>
    %392 = arith.addf %389, %391 : vector<8x128xf32>
    %c0_109 = arith.constant 0 : index
    %c0_110 = arith.constant 0 : index
    %393 = vector.load %arg9[%c0_109, %c0_110] : memref<8x128xf32, #tpu.memory_space<vmem>>, vector<8x128xf32>
    tpu.vector_store %arg9[%c0_109, %c0_110], %392 {strides = array<i32>} : memref<8x128xf32, #tpu.memory_space<vmem>>, vector<8x128xf32>,
    return
  }
}

</mosaic_0001>

<llo_original>
// kernel: enhanced_lstm_forward.1
$region0: #{enhanced_lstm_forward.1}
  #allocation0 [shape = 'u32[]', space=smem, size = 0x4, offset = 0x4, fixed_abs, tag = 'smem constant byte address 0x4 - core index']
  #allocation1 [shape = 'u32[72,128]{1,0:T(1,128)}', space=vmem, size = 0x9000, scoped, tag = 'internal scratch']
  #allocation2 [shape = 'f32[64,128]{1,0:T(8,128)}', space=vmem, size = 0x8000, scoped, tag = 'scratch operand']
  %s0 = inlined_call_operand.vmem [shape: f32[64,32], index: 0, kind: input, shape index: {}]
  %s1 = inlined_call_operand.vmem [shape: f32[32,128], index: 1, kind: input, shape index: {}]
  %s2 = inlined_call_operand.vmem [shape: f32[32,128], index: 2, kind: input, shape index: {}]
  %s3 = inlined_call_operand.vmem [shape: f32[1,128], index: 3, kind: input, shape index: {}]
  %s4 = inlined_call_operand.vmem [shape: f32[32,128], index: 4, kind: input, shape index: {}]
  %s5 = inlined_call_operand.vmem [shape: f32[32,128], index: 5, kind: input, shape index: {}]
  %s6 = inlined_call_operand.vmem [shape: f32[1,128], index: 6, kind: input, shape index: {}]
  %s7 = inlined_call_operand.vmem [shape: f32[32,128], index: 7, kind: input, shape index: {}]
  %s8 = inlined_call_operand.vmem [shape: f32[1,128], index: 8, kind: input, shape index: {}]
  %s9 = inlined_call_operand.vmem [shape: f32[8,128], index: 9, kind: output, shape index: {}]
  %s10 = sld [smem:[#allocation0]]
  $region46: #{enhanced_lstm_forward.1} parent=0
    _
  %s12 = ssub.s32 1, %s10
  %s13 = scalar_select 0, %s12, %s10
  // Predicated region
  $region2: #{enhanced_lstm_forward.1} parent=0 // pred_check
    _
  $region3: #{enhanced_lstm_forward.1} parent=0 // pred_check_branch
    %15 = sbr.rel (0) target = $region5
  $region4: #{enhanced_lstm_forward.1} parent=0 // pred_region
    _
  $region5: #{enhanced_lstm_forward.1} parent=0 // pred_fallthru
    _
  // Predicated region
  $region6: #{enhanced_lstm_forward.1} parent=0 // pred_check
    _
  $region7: #{enhanced_lstm_forward.1} parent=0 // pred_check_branch
    %17 = sbr.rel (0) target = $region9
  $region8: #{enhanced_lstm_forward.1} parent=0 // pred_region
    _
  $region9: #{enhanced_lstm_forward.1} parent=0 // pred_fallthru
    _
  // Predicated region
  $region10: #{enhanced_lstm_forward.1} parent=0 // pred_check
    _
  $region11: #{enhanced_lstm_forward.1} parent=0 // pred_check_branch
    %19 = sbr.rel (0) target = $region13
  $region12: #{enhanced_lstm_forward.1} parent=0 // pred_region
    _
  $region13: #{enhanced_lstm_forward.1} parent=0 // pred_fallthru
    _
  // Predicated region
  $region14: #{enhanced_lstm_forward.1} parent=0 // pred_check
    _
  $region15: #{enhanced_lstm_forward.1} parent=0 // pred_check_branch
    %21 = sbr.rel (0) target = $region17
  $region16: #{enhanced_lstm_forward.1} parent=0 // pred_region
    _
  $region17: #{enhanced_lstm_forward.1} parent=0 // pred_fallthru
    _
  // Predicated region
  $region18: #{enhanced_lstm_forward.1} parent=0 // pred_check
    _
  $region19: #{enhanced_lstm_forward.1} parent=0 // pred_check_branch
    %23 = sbr.rel (0) target = $region21
  $region20: #{enhanced_lstm_forward.1} parent=0 // pred_region
    _
  $region21: #{enhanced_lstm_forward.1} parent=0 // pred_fallthru
    _
  // Predicated region
  $region22: #{enhanced_lstm_forward.1} parent=0 // pred_check
    _
  $region23: #{enhanced_lstm_forward.1} parent=0 // pred_check_branch
    %25 = sbr.rel (0) target = $region25
  $region24: #{enhanced_lstm_forward.1} parent=0 // pred_region
    _
  $region25: #{enhanced_lstm_forward.1} parent=0 // pred_fallthru
    _
  // Predicated region
  $region26: #{enhanced_lstm_forward.1} parent=0 // pred_check
    _
  $region27: #{enhanced_lstm_forward.1} parent=0 // pred_check_branch
    %27 = sbr.rel (0) target = $region29
  $region28: #{enhanced_lstm_forward.1} parent=0 // pred_region
    _
  $region29: #{enhanced_lstm_forward.1} parent=0 // pred_fallthru
    _
  // Predicated region
  $region30: #{enhanced_lstm_forward.1} parent=0 // pred_check
    _
  $region31: #{enhanced_lstm_forward.1} parent=0 // pred_check_branch
    %29 = sbr.rel (0) target = $region33
  $region32: #{enhanced_lstm_forward.1} parent=0 // pred_region
    _
  $region33: #{enhanced_lstm_forward.1} parent=0 // pred_fallthru
    _
  // Predicated region
  $region34: #{enhanced_lstm_forward.1} parent=0 // pred_check
    _
  $region35: #{enhanced_lstm_forward.1} parent=0 // pred_check_branch
    %31 = sbr.rel (0) target = $region37
  $region36: #{enhanced_lstm_forward.1} parent=0 // pred_region
    _
  $region37: #{enhanced_lstm_forward.1} parent=0 // pred_fallthru
    _
  %v32 = vld [vmem:[%s0] sm:$0xff]
  %v33 = vld [vmem:[%s0 + $0x8] sm:$0xff]
  %v34 = vld [vmem:[%s0 + $0x10] sm:$0xff]
  %v35 = vld [vmem:[%s0 + $0x18] sm:$0xff]
  %v36 = vld [vmem:[%s0 + $0x20] sm:$0xff]
  %v37 = vld [vmem:[%s0 + $0x28] sm:$0xff]
  %v38 = vld [vmem:[%s0 + $0x30] sm:$0xff]
  %v39 = vld [vmem:[%s0 + $0x38] sm:$0xff]
  %v40 = vld [vmem:[%s1] sm:$0xff]
  %v41 = vld [vmem:[%s1 + $0x8] sm:$0xff]
  %v42 = vld [vmem:[%s1 + $0x10] sm:$0xff]
  %v43 = vld [vmem:[%s1 + $0x18] sm:$0xff]
  %v44 = vld [vmem:[%s3] sm:$0x1]
  %v46 = vperm.slane %v44, 0
  %vm48 = vcmask 261120
  %v50 = vsel %vm48, %v32, 0
  %v53 = vsel %vm48, %v33, 0
  %v56 = vsel %vm48, %v34, 0
  %v59 = vsel %vm48, %v35, 0
  %v62 = vsel %vm48, %v36, 0
  %v65 = vsel %vm48, %v37, 0
  %v68 = vsel %vm48, %v38, 0
  %v71 = vsel %vm48, %v39, 0
  %73 = vmatpush.msra.mxu0 0.0
  %74 = vmatpush.msra.mxu0 0.0
  %75 = vmatpush.msra.mxu0 0.0
  %76 = vmatpush.msra.mxu0 0.0
  %77 = vmatpush.msra.mxu0 0.0
  %78 = vmatpush.msra.mxu0 0.0
  %79 = vmatpush.msra.mxu0 0.0
  %80 = vmatpush.msra.mxu0 0.0
  %81 = vmatpush.msra.mxu0 0.0
  %82 = vmatpush.msra.mxu0 0.0
  %83 = vmatpush.msra.mxu0 0.0
  %84 = vmatpush.msra.mxu0 0.0
  %85 = vmatpush.msra.mxu0 %v43
  %86 = vmatpush.msra.mxu0 %v42
  %87 = vmatpush.msra.mxu0 %v41
  %88 = vmatpush.msra.mxu0 %v40
  %89 = vmatmul.f32.gmra.mxu0 %v50
  %v90 = vpop.f32.mrf.mxu0
  %v91 = vadd.f32 %v46, %v90
  %92 = vmatmul.f32.gmra.mxu0 %v53
  %v93 = vpop.f32.mrf.mxu0
  %v94 = vadd.f32 %v46, %v93
  %95 = vmatmul.f32.gmra.mxu0 %v56
  %v96 = vpop.f32.mrf.mxu0
  %v97 = vadd.f32 %v46, %v96
  %98 = vmatmul.f32.gmra.mxu0 %v59
  %v99 = vpop.f32.mrf.mxu0
  %v100 = vadd.f32 %v46, %v99
  %101 = vmatmul.f32.gmra.mxu0 %v62
  %v102 = vpop.f32.mrf.mxu0
  %v103 = vadd.f32 %v46, %v102
  %104 = vmatmul.f32.gmra.mxu0 %v65
  %v105 = vpop.f32.mrf.mxu0
  %v106 = vadd.f32 %v46, %v105
  %107 = vmatmul.f32.gmra.mxu0 %v68
  %v108 = vpop.f32.mrf.mxu0
  %v109 = vadd.f32 %v46, %v108
  %110 = vmatmul.f32.gmra.mxu0 %v71
  %v111 = vpop.f32.mrf.mxu0
  %v112 = vadd.f32 %v46, %v111
  %113 = vdwg.mxu0
  %114 = vst [vmem:[#allocation2] sm:$0xff] %v91
  %115 = vst [vmem:[#allocation2 + $0x8] sm:$0xff] %v94
  %116 = vst [vmem:[#allocation2 + $0x10] sm:$0xff] %v97
  %117 = vst [vmem:[#allocation2 + $0x18] sm:$0xff] %v100
  %118 = vst [vmem:[#allocation2 + $0x20] sm:$0xff] %v103
  %119 = vst [vmem:[#allocation2 + $0x28] sm:$0xff] %v106
  %120 = vst [vmem:[#allocation2 + $0x30] sm:$0xff] %v109
  %121 = vst [vmem:[#allocation2 + $0x38] sm:$0xff] %v112
  %v122 = vld [vmem:[%s2] sm:$0xff]
  %v123 = vld [vmem:[%s2 + $0x8] sm:$0xff]
  %v124 = vld [vmem:[%s2 + $0x10] sm:$0xff]
  %v125 = vld [vmem:[%s2 + $0x18] sm:$0xff]
  %v126 = vld [vmem:[%s4] sm:$0xff]
  %v127 = vld [vmem:[%s4 + $0x8] sm:$0xff]
  %v128 = vld [vmem:[%s4 + $0x10] sm:$0xff]
  %v129 = vld [vmem:[%s4 + $0x18] sm:$0xff]
  %v130 = vld [vmem:[%s5] sm:$0xff]
  %v131 = vld [vmem:[%s5 + $0x8] sm:$0xff]
  %v132 = vld [vmem:[%s5 + $0x10] sm:$0xff]
  %v133 = vld [vmem:[%s5 + $0x18] sm:$0xff]
  %v134 = vld [vmem:[%s6] sm:$0x1]
  %v135 = vld [vmem:[#allocation2] sm:$0xff]
  %v137 = vsel %vm48, 0.0, 0
  %139 = vmatpush.msra.mxu0 0.0
  %140 = vmatpush.msra.mxu0 0.0
  %141 = vmatpush.msra.mxu0 0.0
  %142 = vmatpush.msra.mxu0 0.0
  %143 = vmatpush.msra.mxu0 0.0
  %144 = vmatpush.msra.mxu0 0.0
  %145 = vmatpush.msra.mxu0 0.0
  %146 = vmatpush.msra.mxu0 0.0
  %147 = vmatpush.msra.mxu0 0.0
  %148 = vmatpush.msra.mxu0 0.0
  %149 = vmatpush.msra.mxu0 0.0
  %150 = vmatpush.msra.mxu0 0.0
  %151 = vmatpush.msra.mxu0 %v125
  %152 = vmatpush.msra.mxu0 %v124
  %153 = vmatpush.msra.mxu0 %v123
  %154 = vmatpush.msra.mxu0 %v122
  %155 = vmatmul.f32.gmra.mxu0 %v137
  %v156 = vpop.f32.mrf.mxu0
  %v157 = vadd.f32 0.0, %v156
  %158 = vdwg.mxu0
  %v159 = vadd.f32 %v135, %v157
  %v160 = vxor.u32 %v159, 2147483648
  %v161 = vmul.f32 %v160, 1.442695
  %v162 = vpow.pop %v161
  %v163 = vadd.f32 %v162, 1.0
  %v164 = vrcp.pop %v163
  %v165 = vmul.f32 %v163, %v164
  %v166 = vsub.f32 1.0, %v165
  %v167 = vmul.f32 %v164, %v166
  %v168 = vadd.f32 %v164, %v167
  %vm169 = vweird.f32 %v163
  %vm170 = vweird.f32 %v164
  %vm171 = vmor %vm169, %vm170
  %v172 = vsel %vm171, %v164, %v168
  %v173 = vand.u32 2147483647, %v163
  %vm174 = vcmp.eq.f32.partialorder %v173, 8.507059e+37
  %v175 = vand.u32 %v163, 2147483648
  %v176 = vor.u32 1.1754944e-38, %v175
  %v177 = vsel %vm174, %v176, %v172
  %v178 = vmul.f32 1.0, %v177
  %v179 = vmul.f32 %v178, 2.0
  %v180 = vsub.f32 %v179, 1.0
  %v181 = vmul.f32 %v178, 0.0
  %183 = vrot.lane.b32.xlu0 %v180, 64
  %v184 = vpop.permute.xlu0 %183
  %v186 = vmul.f32 %v178, %v184
  %188 = vrot.lane.b32.xlu0 %v186, 32
  %v189 = vpop.permute.xlu0 %188
  %v191 = vadd.f32 %v181, %v189
  %v192 = vtanh.pop %v191
  %194 = vrot.lane.b32.xlu0 %v192, 64
  %v195 = vpop.permute.xlu0 %194
  %v197 = vmul.f32 %v178, %v195
  %198 = vmatpush.msra.mxu0 0.0
  %199 = vmatpush.msra.mxu0 0.0
  %200 = vmatpush.msra.mxu0 0.0
  %201 = vmatpush.msra.mxu0 0.0
  %202 = vmatpush.msra.mxu0 0.0
  %203 = vmatpush.msra.mxu0 0.0
  %204 = vmatpush.msra.mxu0 0.0
  %205 = vmatpush.msra.mxu0 0.0
  %206 = vmatpush.msra.mxu0 0.0
  %207 = vmatpush.msra.mxu0 0.0
  %208 = vmatpush.msra.mxu0 0.0
  %209 = vmatpush.msra.mxu0 0.0
  %210 = vmatpush.msra.mxu0 %v133
  %211 = vmatpush.msra.mxu0 %v132
  %212 = vmatpush.msra.mxu0 %v131
  %213 = vmatpush.msra.mxu0 %v130
  %214 = vmatmul.f32.gmra.mxu0 %v137
  %v215 = vpop.f32.mrf.mxu0
  %v216 = vadd.f32 0.0, %v215
  %217 = vdwg.mxu0
  %219 = vrot.lane.b32.xlu0 %v197, 32
  %v220 = vpop.permute.xlu0 %219
  %v221 = vsel %vm48, %v220, 0
  %223 = vmatpush.msra.mxu0 0.0
  %224 = vmatpush.msra.mxu0 0.0
  %225 = vmatpush.msra.mxu0 0.0
  %226 = vmatpush.msra.mxu0 0.0
  %227 = vmatpush.msra.mxu0 0.0
  %228 = vmatpush.msra.mxu0 0.0
  %229 = vmatpush.msra.mxu0 0.0
  %230 = vmatpush.msra.mxu0 0.0
  %231 = vmatpush.msra.mxu0 0.0
  %232 = vmatpush.msra.mxu0 0.0
  %233 = vmatpush.msra.mxu0 0.0
  %234 = vmatpush.msra.mxu0 0.0
  %235 = vmatpush.msra.mxu0 %v129
  %236 = vmatpush.msra.mxu0 %v128
  %237 = vmatpush.msra.mxu0 %v127
  %238 = vmatpush.msra.mxu0 %v126
  %239 = vmatmul.f32.gmra.mxu0 %v221
  %v240 = vpop.f32.mrf.mxu0
  %v241 = vadd.f32 %v216, %v240
  %242 = vdwg.mxu0
  %v244 = vperm.slane %v134, 0
  %v246 = vadd.f32 %v241, %v244
  %v247 = vxor.u32 %v246, 2147483648
  %v248 = vmul.f32 %v247, 1.442695
  %v249 = vpow.pop %v248
  %v250 = vadd.f32 %v249, 1.0
  %v251 = vrcp.pop %v250
  %v252 = vmul.f32 %v250, %v251
  %v253 = vsub.f32 1.0, %v252
  %v254 = vmul.f32 %v251, %v253
  %v255 = vadd.f32 %v251, %v254
  %vm256 = vweird.f32 %v250
  %vm257 = vweird.f32 %v251
  %vm258 = vmor %vm256, %vm257
  %v259 = vsel %vm258, %v251, %v255
  %v260 = vand.u32 2147483647, %v250
  %vm261 = vcmp.eq.f32.partialorder %v260, 8.507059e+37
  %v262 = vand.u32 %v250, 2147483648
  %v263 = vor.u32 1.1754944e-38, %v262
  %v264 = vsel %vm261, %v263, %v259
  %v265 = vmul.f32 1.0, %v264
  %v266 = vmul.f32 %v265, 2.0
  %v267 = vsub.f32 %v266, 1.0
  %v268 = vmul.f32 %v265, 0.0
  %270 = vrot.lane.b32.xlu0 %v267, 64
  %v271 = vpop.permute.xlu0 %270
  %v273 = vmul.f32 %v265, %v271
  %275 = vrot.lane.b32.xlu0 %v273, 32
  %v276 = vpop.permute.xlu0 %275
  %v278 = vadd.f32 %v268, %v276
  %v279 = vtanh.pop %v278
  %281 = vrot.lane.b32.xlu0 %v279, 64
  %v282 = vpop.permute.xlu0 %281
  %v284 = vmul.f32 %v265, %v282
  %s285 = scalar_lea.vmem [#allocation2], 8
  %v286 = vld [vmem:[%s285] sm:$0xff]
  %287 = vmatpush.msra.mxu0 0.0
  %288 = vmatpush.msra.mxu0 0.0
  %289 = vmatpush.msra.mxu0 0.0
  %290 = vmatpush.msra.mxu0 0.0
  %291 = vmatpush.msra.mxu0 0.0
  %292 = vmatpush.msra.mxu0 0.0
  %293 = vmatpush.msra.mxu0 0.0
  %294 = vmatpush.msra.mxu0 0.0
  %295 = vmatpush.msra.mxu0 0.0
  %296 = vmatpush.msra.mxu0 0.0
  %297 = vmatpush.msra.mxu0 0.0
  %298 = vmatpush.msra.mxu0 0.0
  %299 = vmatpush.msra.mxu0 %v125
  %300 = vmatpush.msra.mxu0 %v124
  %301 = vmatpush.msra.mxu0 %v123
  %302 = vmatpush.msra.mxu0 %v122
  %303 = vmatmul.f32.gmra.mxu0 %v221
  %v304 = vpop.f32.mrf.mxu0
  %v305 = vadd.f32 0.0, %v304
  %306 = vdwg.mxu0
  %v307 = vadd.f32 %v286, %v305
  %v308 = vxor.u32 %v307, 2147483648
  %v309 = vmul.f32 %v308, 1.442695
  %v310 = vpow.pop %v309
  %v311 = vadd.f32 %v310, 1.0
  %v312 = vrcp.pop %v311
  %v313 = vmul.f32 %v311, %v312
  %v314 = vsub.f32 1.0, %v313
  %v315 = vmul.f32 %v312, %v314
  %v316 = vadd.f32 %v312, %v315
  %vm317 = vweird.f32 %v311
  %vm318 = vweird.f32 %v312
  %vm319 = vmor %vm317, %vm318
  %v320 = vsel %vm319, %v312, %v316
  %v321 = vand.u32 2147483647, %v311
  %vm322 = vcmp.eq.f32.partialorder %v321, 8.507059e+37
  %v323 = vand.u32 %v311, 2147483648
  %v324 = vor.u32 1.1754944e-38, %v323
  %v325 = vsel %vm322, %v324, %v320
  %v326 = vmul.f32 1.0, %v325
  %v327 = vmul.f32 %v326, 2.0
  %v328 = vsub.f32 %v327, 1.0
  %v329 = vmul.f32 %v326, %v191
  %331 = vrot.lane.b32.xlu0 %v328, 64
  %v332 = vpop.permute.xlu0 %331
  %v334 = vmul.f32 %v326, %v332
  %336 = vrot.lane.b32.xlu0 %v334, 32
  %v337 = vpop.permute.xlu0 %336
  %v339 = vadd.f32 %v329, %v337
  %v340 = vtanh.pop %v339
  %342 = vrot.lane.b32.xlu0 %v340, 64
  %v343 = vpop.permute.xlu0 %342
  %v345 = vmul.f32 %v326, %v343
  %347 = vrot.lane.b32.xlu0 %v284, 32
  %v348 = vpop.permute.xlu0 %347
  %v349 = vsel %vm48, %v348, 0
  %351 = vmatpush.msra.mxu0 0.0
  %352 = vmatpush.msra.mxu0 0.0
  %353 = vmatpush.msra.mxu0 0.0
  %354 = vmatpush.msra.mxu0 0.0
  %355 = vmatpush.msra.mxu0 0.0
  %356 = vmatpush.msra.mxu0 0.0
  %357 = vmatpush.msra.mxu0 0.0
  %358 = vmatpush.msra.mxu0 0.0
  %359 = vmatpush.msra.mxu0 0.0
  %360 = vmatpush.msra.mxu0 0.0
  %361 = vmatpush.msra.mxu0 0.0
  %362 = vmatpush.msra.mxu0 0.0
  %363 = vmatpush.msra.mxu0 %v133
  %364 = vmatpush.msra.mxu0 %v132
  %365 = vmatpush.msra.mxu0 %v131
  %366 = vmatpush.msra.mxu0 %v130
  %367 = vmatmul.f32.gmra.mxu0 %v349
  %v368 = vpop.f32.mrf.mxu0
  %v369 = vadd.f32 0.0, %v368
  %370 = vdwg.mxu0
  %372 = vrot.lane.b32.xlu0 %v345, 32
  %v373 = vpop.permute.xlu0 %372
  %v374 = vsel %vm48, %v373, 0
  %376 = vmatpush.msra.mxu0 0.0
  %377 = vmatpush.msra.mxu0 0.0
  %378 = vmatpush.msra.mxu0 0.0
  %379 = vmatpush.msra.mxu0 0.0
  %380 = vmatpush.msra.mxu0 0.0
  %381 = vmatpush.msra.mxu0 0.0
  %382 = vmatpush.msra.mxu0 0.0
  %383 = vmatpush.msra.mxu0 0.0
  %384 = vmatpush.msra.mxu0 0.0
  %385 = vmatpush.msra.mxu0 0.0
  %386 = vmatpush.msra.mxu0 0.0
  %387 = vmatpush.msra.mxu0 0.0
  %388 = vmatpush.msra.mxu0 %v129
  %389 = vmatpush.msra.mxu0 %v128
  %390 = vmatpush.msra.mxu0 %v127
  %391 = vmatpush.msra.mxu0 %v126
  %392 = vmatmul.f32.gmra.mxu0 %v374
  %v393 = vpop.f32.mrf.mxu0
  %v394 = vadd.f32 %v369, %v393
  %395 = vdwg.mxu0
  %v396 = vadd.f32 %v394, %v244
  %v397 = vxor.u32 %v396, 2147483648
  %v398 = vmul.f32 %v397, 1.442695
  %v399 = vpow.pop %v398
  %v400 = vadd.f32 %v399, 1.0
  %v401 = vrcp.pop %v400
  %v402 = vmul.f32 %v400, %v401
  %v403 = vsub.f32 1.0, %v402
  %v404 = vmul.f32 %v401, %v403
  %v405 = vadd.f32 %v401, %v404
  %vm406 = vweird.f32 %v400
  %vm407 = vweird.f32 %v401
  %vm408 = vmor %vm406, %vm407
  %v409 = vsel %vm408, %v401, %v405
  %v410 = vand.u32 2147483647, %v400
  %vm411 = vcmp.eq.f32.partialorder %v410, 8.507059e+37
  %v412 = vand.u32 %v400, 2147483648
  %v413 = vor.u32 1.1754944e-38, %v412
  %v414 = vsel %vm411, %v413, %v409
  %v415 = vmul.f32 1.0, %v414
  %v416 = vmul.f32 %v415, 2.0
  %v417 = vsub.f32 %v416, 1.0
  %v418 = vmul.f32 %v415, %v278
  %420 = vrot.lane.b32.xlu0 %v417, 64
  %v421 = vpop.permute.xlu0 %420
  %v423 = vmul.f32 %v415, %v421
  %425 = vrot.lane.b32.xlu0 %v423, 32
  %v426 = vpop.permute.xlu0 %425
  %v428 = vadd.f32 %v418, %v426
  %v429 = vtanh.pop %v428
  %431 = vrot.lane.b32.xlu0 %v429, 64
  %v432 = vpop.permute.xlu0 %431
  %v434 = vmul.f32 %v415, %v432
  %s435 = scalar_lea.vmem [#allocation2], 16
  %v436 = vld [vmem:[%s435] sm:$0xff]
  %437 = vmatpush.msra.mxu0 0.0
  %438 = vmatpush.msra.mxu0 0.0
  %439 = vmatpush.msra.mxu0 0.0
  %440 = vmatpush.msra.mxu0 0.0
  %441 = vmatpush.msra.mxu0 0.0
  %442 = vmatpush.msra.mxu0 0.0
  %443 = vmatpush.msra.mxu0 0.0
  %444 = vmatpush.msra.mxu0 0.0
  %445 = vmatpush.msra.mxu0 0.0
  %446 = vmatpush.msra.mxu0 0.0
  %447 = vmatpush.msra.mxu0 0.0
  %448 = vmatpush.msra.mxu0 0.0
  %449 = vmatpush.msra.mxu0 %v125
  %450 = vmatpush.msra.mxu0 %v124
  %451 = vmatpush.msra.mxu0 %v123
  %452 = vmatpush.msra.mxu0 %v122
  %453 = vmatmul.f32.gmra.mxu0 %v374
  %v454 = vpop.f32.mrf.mxu0
  %v455 = vadd.f32 0.0, %v454
  %456 = vdwg.mxu0
  %v457 = vadd.f32 %v436, %v455
  %v458 = vxor.u32 %v457, 2147483648
  %v459 = vmul.f32 %v458, 1.442695
  %v460 = vpow.pop %v459
  %v461 = vadd.f32 %v460, 1.0
  %v462 = vrcp.pop %v461
  %v463 = vmul.f32 %v461, %v462
  %v464 = vsub.f32 1.0, %v463
  %v465 = vmul.f32 %v462, %v464
  %v466 = vadd.f32 %v462, %v465
  %vm467 = vweird.f32 %v461
  %vm468 = vweird.f32 %v462
  %vm469 = vmor %vm467, %vm468
  %v470 = vsel %vm469, %v462, %v466
  %v471 = vand.u32 2147483647, %v461
  %vm472 = vcmp.eq.f32.partialorder %v471, 8.507059e+37
  %v473 = vand.u32 %v461, 2147483648
  %v474 = vor.u32 1.1754944e-38, %v473
  %v475 = vsel %vm472, %v474, %v470
  %v476 = vmul.f32 1.0, %v475
  %v477 = vmul.f32 %v476, 2.0
  %v478 = vsub.f32 %v477, 1.0
  %v479 = vmul.f32 %v476, %v339
  %481 = vrot.lane.b32.xlu0 %v478, 64
  %v482 = vpop.permute.xlu0 %481
  %v484 = vmul.f32 %v476, %v482
  %486 = vrot.lane.b32.xlu0 %v484, 32
  %v487 = vpop.permute.xlu0 %486
  %v489 = vadd.f32 %v479, %v487
  %v490 = vtanh.pop %v489
  %492 = vrot.lane.b32.xlu0 %v490, 64
  %v493 = vpop.permute.xlu0 %492
  %v495 = vmul.f32 %v476, %v493
  %497 = vrot.lane.b32.xlu0 %v434, 32
  %v498 = vpop.permute.xlu0 %497
  %v499 = vsel %vm48, %v498, 0
  %501 = vmatpush.msra.mxu0 0.0
  %502 = vmatpush.msra.mxu0 0.0
  %503 = vmatpush.msra.mxu0 0.0
  %504 = vmatpush.msra.mxu0 0.0
  %505 = vmatpush.msra.mxu0 0.0
  %506 = vmatpush.msra.mxu0 0.0
  %507 = vmatpush.msra.mxu0 0.0
  %508 = vmatpush.msra.mxu0 0.0
  %509 = vmatpush.msra.mxu0 0.0
  %510 = vmatpush.msra.mxu0 0.0
  %511 = vmatpush.msra.mxu0 0.0
  %512 = vmatpush.msra.mxu0 0.0
  %513 = vmatpush.msra.mxu0 %v133
  %514 = vmatpush.msra.mxu0 %v132
  %515 = vmatpush.msra.mxu0 %v131
  %516 = vmatpush.msra.mxu0 %v130
  %517 = vmatmul.f32.gmra.mxu0 %v499
  %v518 = vpop.f32.mrf.mxu0
  %v519 = vadd.f32 0.0, %v518
  %520 = vdwg.mxu0
  %522 = vrot.lane.b32.xlu0 %v495, 32
  %v523 = vpop.permute.xlu0 %522
  %v524 = vsel %vm48, %v523, 0
  %526 = vmatpush.msra.mxu0 0.0
  %527 = vmatpush.msra.mxu0 0.0
  %528 = vmatpush.msra.mxu0 0.0
  %529 = vmatpush.msra.mxu0 0.0
  %530 = vmatpush.msra.mxu0 0.0
  %531 = vmatpush.msra.mxu0 0.0
  %532 = vmatpush.msra.mxu0 0.0
  %533 = vmatpush.msra.mxu0 0.0
  %534 = vmatpush.msra.mxu0 0.0
  %535 = vmatpush.msra.mxu0 0.0
  %536 = vmatpush.msra.mxu0 0.0
  %537 = vmatpush.msra.mxu0 0.0
  %538 = vmatpush.msra.mxu0 %v129
  %539 = vmatpush.msra.mxu0 %v128
  %540 = vmatpush.msra.mxu0 %v127
  %541 = vmatpush.msra.mxu0 %v126
  %542 = vmatmul.f32.gmra.mxu0 %v524
  %v543 = vpop.f32.mrf.mxu0
  %v544 = vadd.f32 %v519, %v543
  %545 = vdwg.mxu0
  %v546 = vadd.f32 %v544, %v244
  %v547 = vxor.u32 %v546, 2147483648
  %v548 = vmul.f32 %v547, 1.442695
  %v549 = vpow.pop %v548
  %v550 = vadd.f32 %v549, 1.0
  %v551 = vrcp.pop %v550
  %v552 = vmul.f32 %v550, %v551
  %v553 = vsub.f32 1.0, %v552
  %v554 = vmul.f32 %v551, %v553
  %v555 = vadd.f32 %v551, %v554
  %vm556 = vweird.f32 %v550
  %vm557 = vweird.f32 %v551
  %vm558 = vmor %vm556, %vm557
  %v559 = vsel %vm558, %v551, %v555
  %v560 = vand.u32 2147483647, %v550
  %vm561 = vcmp.eq.f32.partialorder %v560, 8.507059e+37
  %v562 = vand.u32 %v550, 2147483648
  %v563 = vor.u32 1.1754944e-38, %v562
  %v564 = vsel %vm561, %v563, %v559
  %v565 = vmul.f32 1.0, %v564
  %v566 = vmul.f32 %v565, 2.0
  %v567 = vsub.f32 %v566, 1.0
  %v568 = vmul.f32 %v565, %v428
  %570 = vrot.lane.b32.xlu0 %v567, 64
  %v571 = vpop.permute.xlu0 %570
  %v573 = vmul.f32 %v565, %v571
  %575 = vrot.lane.b32.xlu0 %v573, 32
  %v576 = vpop.permute.xlu0 %575
  %v578 = vadd.f32 %v568, %v576
  %v579 = vtanh.pop %v578
  %581 = vrot.lane.b32.xlu0 %v579, 64
  %v582 = vpop.permute.xlu0 %581
  %v584 = vmul.f32 %v565, %v582
  %s585 = scalar_lea.vmem [#allocation2], 24
  %v586 = vld [vmem:[%s585] sm:$0xff]
  %587 = vmatpush.msra.mxu0 0.0
  %588 = vmatpush.msra.mxu0 0.0
  %589 = vmatpush.msra.mxu0 0.0
  %590 = vmatpush.msra.mxu0 0.0
  %591 = vmatpush.msra.mxu0 0.0
  %592 = vmatpush.msra.mxu0 0.0
  %593 = vmatpush.msra.mxu0 0.0
  %594 = vmatpush.msra.mxu0 0.0
  %595 = vmatpush.msra.mxu0 0.0
  %596 = vmatpush.msra.mxu0 0.0
  %597 = vmatpush.msra.mxu0 0.0
  %598 = vmatpush.msra.mxu0 0.0
  %599 = vmatpush.msra.mxu0 %v125
  %600 = vmatpush.msra.mxu0 %v124
  %601 = vmatpush.msra.mxu0 %v123
  %602 = vmatpush.msra.mxu0 %v122
  %603 = vmatmul.f32.gmra.mxu0 %v524
  %v604 = vpop.f32.mrf.mxu0
  %v605 = vadd.f32 0.0, %v604
  %606 = vdwg.mxu0
  %v607 = vadd.f32 %v586, %v605
  %v608 = vxor.u32 %v607, 2147483648
  %v609 = vmul.f32 %v608, 1.442695
  %v610 = vpow.pop %v609
  %v611 = vadd.f32 %v610, 1.0
  %v612 = vrcp.pop %v611
  %v613 = vmul.f32 %v611, %v612
  %v614 = vsub.f32 1.0, %v613
  %v615 = vmul.f32 %v612, %v614
  %v616 = vadd.f32 %v612, %v615
  %vm617 = vweird.f32 %v611
  %vm618 = vweird.f32 %v612
  %vm619 = vmor %vm617, %vm618
  %v620 = vsel %vm619, %v612, %v616
  %v621 = vand.u32 2147483647, %v611
  %vm622 = vcmp.eq.f32.partialorder %v621, 8.507059e+37
  %v623 = vand.u32 %v611, 2147483648
  %v624 = vor.u32 1.1754944e-38, %v623
  %v625 = vsel %vm622, %v624, %v620
  %v626 = vmul.f32 1.0, %v625
  %v627 = vmul.f32 %v626, 2.0
  %v628 = vsub.f32 %v627, 1.0
  %v629 = vmul.f32 %v626, %v489
  %631 = vrot.lane.b32.xlu0 %v628, 64
  %v632 = vpop.permute.xlu0 %631
  %v634 = vmul.f32 %v626, %v632
  %636 = vrot.lane.b32.xlu0 %v634, 32
  %v637 = vpop.permute.xlu0 %636
  %v639 = vadd.f32 %v629, %v637
  %v640 = vtanh.pop %v639
  %642 = vrot.lane.b32.xlu0 %v640, 64
  %v643 = vpop.permute.xlu0 %642
  %v645 = vmul.f32 %v626, %v643
  %647 = vrot.lane.b32.xlu0 %v584, 32
  %v648 = vpop.permute.xlu0 %647
  %v649 = vsel %vm48, %v648, 0
  %651 = vmatpush.msra.mxu0 0.0
  %652 = vmatpush.msra.mxu0 0.0
  %653 = vmatpush.msra.mxu0 0.0
  %654 = vmatpush.msra.mxu0 0.0
  %655 = vmatpush.msra.mxu0 0.0
  %656 = vmatpush.msra.mxu0 0.0
  %657 = vmatpush.msra.mxu0 0.0
  %658 = vmatpush.msra.mxu0 0.0
  %659 = vmatpush.msra.mxu0 0.0
  %660 = vmatpush.msra.mxu0 0.0
  %661 = vmatpush.msra.mxu0 0.0
  %662 = vmatpush.msra.mxu0 0.0
  %663 = vmatpush.msra.mxu0 %v133
  %664 = vmatpush.msra.mxu0 %v132
  %665 = vmatpush.msra.mxu0 %v131
  %666 = vmatpush.msra.mxu0 %v130
  %667 = vmatmul.f32.gmra.mxu0 %v649
  %v668 = vpop.f32.mrf.mxu0
  %v669 = vadd.f32 0.0, %v668
  %670 = vdwg.mxu0
  %672 = vrot.lane.b32.xlu0 %v645, 32
  %v673 = vpop.permute.xlu0 %672
  %v674 = vsel %vm48, %v673, 0
  %676 = vmatpush.msra.mxu0 0.0
  %677 = vmatpush.msra.mxu0 0.0
  %678 = vmatpush.msra.mxu0 0.0
  %679 = vmatpush.msra.mxu0 0.0
  %680 = vmatpush.msra.mxu0 0.0
  %681 = vmatpush.msra.mxu0 0.0
  %682 = vmatpush.msra.mxu0 0.0
  %683 = vmatpush.msra.mxu0 0.0
  %684 = vmatpush.msra.mxu0 0.0
  %685 = vmatpush.msra.mxu0 0.0
  %686 = vmatpush.msra.mxu0 0.0
  %687 = vmatpush.msra.mxu0 0.0
  %688 = vmatpush.msra.mxu0 %v129
  %689 = vmatpush.msra.mxu0 %v128
  %690 = vmatpush.msra.mxu0 %v127
  %691 = vmatpush.msra.mxu0 %v126
  %692 = vmatmul.f32.gmra.mxu0 %v674
  %v693 = vpop.f32.mrf.mxu0
  %v694 = vadd.f32 %v669, %v693
  %695 = vdwg.mxu0
  %v696 = vadd.f32 %v694, %v244
  %v697 = vxor.u32 %v696, 2147483648
  %v698 = vmul.f32 %v697, 1.442695
  %v699 = vpow.pop %v698
  %v700 = vadd.f32 %v699, 1.0
  %v701 = vrcp.pop %v700
  %v702 = vmul.f32 %v700, %v701
  %v703 = vsub.f32 1.0, %v702
  %v704 = vmul.f32 %v701, %v703
  %v705 = vadd.f32 %v701, %v704
  %vm706 = vweird.f32 %v700
  %vm707 = vweird.f32 %v701
  %vm708 = vmor %vm706, %vm707
  %v709 = vsel %vm708, %v701, %v705
  %v710 = vand.u32 2147483647, %v700
  %vm711 = vcmp.eq.f32.partialorder %v710, 8.507059e+37
  %v712 = vand.u32 %v700, 2147483648
  %v713 = vor.u32 1.1754944e-38, %v712
  %v714 = vsel %vm711, %v713, %v709
  %v715 = vmul.f32 1.0, %v714
  %v716 = vmul.f32 %v715, 2.0
  %v717 = vsub.f32 %v716, 1.0
  %v718 = vmul.f32 %v715, %v578
  %720 = vrot.lane.b32.xlu0 %v717, 64
  %v721 = vpop.permute.xlu0 %720
  %v723 = vmul.f32 %v715, %v721
  %725 = vrot.lane.b32.xlu0 %v723, 32
  %v726 = vpop.permute.xlu0 %725
  %v728 = vadd.f32 %v718, %v726
  %v729 = vtanh.pop %v728
  %731 = vrot.lane.b32.xlu0 %v729, 64
  %v732 = vpop.permute.xlu0 %731
  %v734 = vmul.f32 %v715, %v732
  %s735 = scalar_lea.vmem [#allocation2], 32
  %v736 = vld [vmem:[%s735] sm:$0xff]
  %737 = vmatpush.msra.mxu0 0.0
  %738 = vmatpush.msra.mxu0 0.0
  %739 = vmatpush.msra.mxu0 0.0
  %740 = vmatpush.msra.mxu0 0.0
  %741 = vmatpush.msra.mxu0 0.0
  %742 = vmatpush.msra.mxu0 0.0
  %743 = vmatpush.msra.mxu0 0.0
  %744 = vmatpush.msra.mxu0 0.0
  %745 = vmatpush.msra.mxu0 0.0
  %746 = vmatpush.msra.mxu0 0.0
  %747 = vmatpush.msra.mxu0 0.0
  %748 = vmatpush.msra.mxu0 0.0
  %749 = vmatpush.msra.mxu0 %v125
  %750 = vmatpush.msra.mxu0 %v124
  %751 = vmatpush.msra.mxu0 %v123
  %752 = vmatpush.msra.mxu0 %v122
  %753 = vmatmul.f32.gmra.mxu0 %v674
  %v754 = vpop.f32.mrf.mxu0
  %v755 = vadd.f32 0.0, %v754
  %756 = vdwg.mxu0
  %v757 = vadd.f32 %v736, %v755
  %v758 = vxor.u32 %v757, 2147483648
  %v759 = vmul.f32 %v758, 1.442695
  %v760 = vpow.pop %v759
  %v761 = vadd.f32 %v760, 1.0
  %v762 = vrcp.pop %v761
  %v763 = vmul.f32 %v761, %v762
  %v764 = vsub.f32 1.0, %v763
  %v765 = vmul.f32 %v762, %v764
  %v766 = vadd.f32 %v762, %v765
  %vm767 = vweird.f32 %v761
  %vm768 = vweird.f32 %v762
  %vm769 = vmor %vm767, %vm768
  %v770 = vsel %vm769, %v762, %v766
  %v771 = vand.u32 2147483647, %v761
  %vm772 = vcmp.eq.f32.partialorder %v771, 8.507059e+37
  %v773 = vand.u32 %v761, 2147483648
  %v774 = vor.u32 1.1754944e-38, %v773
  %v775 = vsel %vm772, %v774, %v770
  %v776 = vmul.f32 1.0, %v775
  %v777 = vmul.f32 %v776, 2.0
  %v778 = vsub.f32 %v777, 1.0
  %v779 = vmul.f32 %v776, %v639
  %781 = vrot.lane.b32.xlu0 %v778, 64
  %v782 = vpop.permute.xlu0 %781
  %v784 = vmul.f32 %v776, %v782
  %786 = vrot.lane.b32.xlu0 %v784, 32
  %v787 = vpop.permute.xlu0 %786
  %v789 = vadd.f32 %v779, %v787
  %v790 = vtanh.pop %v789
  %792 = vrot.lane.b32.xlu0 %v790, 64
  %v793 = vpop.permute.xlu0 %792
  %v795 = vmul.f32 %v776, %v793
  %797 = vrot.lane.b32.xlu0 %v734, 32
  %v798 = vpop.permute.xlu0 %797
  %v799 = vsel %vm48, %v798, 0
  %801 = vmatpush.msra.mxu0 0.0
  %802 = vmatpush.msra.mxu0 0.0
  %803 = vmatpush.msra.mxu0 0.0
  %804 = vmatpush.msra.mxu0 0.0
  %805 = vmatpush.msra.mxu0 0.0
  %806 = vmatpush.msra.mxu0 0.0
  %807 = vmatpush.msra.mxu0 0.0
  %808 = vmatpush.msra.mxu0 0.0
  %809 = vmatpush.msra.mxu0 0.0
  %810 = vmatpush.msra.mxu0 0.0
  %811 = vmatpush.msra.mxu0 0.0
  %812 = vmatpush.msra.mxu0 0.0
  %813 = vmatpush.msra.mxu0 %v133
  %814 = vmatpush.msra.mxu0 %v132
  %815 = vmatpush.msra.mxu0 %v131
  %816 = vmatpush.msra.mxu0 %v130
  %817 = vmatmul.f32.gmra.mxu0 %v799
  %v818 = vpop.f32.mrf.mxu0
  %v819 = vadd.f32 0.0, %v818
  %820 = vdwg.mxu0
  %822 = vrot.lane.b32.xlu0 %v795, 32
  %v823 = vpop.permute.xlu0 %822
  %v824 = vsel %vm48, %v823, 0
  %826 = vmatpush.msra.mxu0 0.0
  %827 = vmatpush.msra.mxu0 0.0
  %828 = vmatpush.msra.mxu0 0.0
  %829 = vmatpush.msra.mxu0 0.0
  %830 = vmatpush.msra.mxu0 0.0
  %831 = vmatpush.msra.mxu0 0.0
  %832 = vmatpush.msra.mxu0 0.0
  %833 = vmatpush.msra.mxu0 0.0
  %834 = vmatpush.msra.mxu0 0.0
  %835 = vmatpush.msra.mxu0 0.0
  %836 = vmatpush.msra.mxu0 0.0
  %837 = vmatpush.msra.mxu0 0.0
  %838 = vmatpush.msra.mxu0 %v129
  %839 = vmatpush.msra.mxu0 %v128
  %840 = vmatpush.msra.mxu0 %v127
  %841 = vmatpush.msra.mxu0 %v126
  %842 = vmatmul.f32.gmra.mxu0 %v824
  %v843 = vpop.f32.mrf.mxu0
  %v844 = vadd.f32 %v819, %v843
  %845 = vdwg.mxu0
  %v846 = vadd.f32 %v844, %v244
  %v847 = vxor.u32 %v846, 2147483648
  %v848 = vmul.f32 %v847, 1.442695
  %v849 = vpow.pop %v848
  %v850 = vadd.f32 %v849, 1.0
  %v851 = vrcp.pop %v850
  %v852 = vmul.f32 %v850, %v851
  %v853 = vsub.f32 1.0, %v852
  %v854 = vmul.f32 %v851, %v853
  %v855 = vadd.f32 %v851, %v854
  %vm856 = vweird.f32 %v850
  %vm857 = vweird.f32 %v851
  %vm858 = vmor %vm856, %vm857
  %v859 = vsel %vm858, %v851, %v855
  %v860 = vand.u32 2147483647, %v850
  %vm861 = vcmp.eq.f32.partialorder %v860, 8.507059e+37
  %v862 = vand.u32 %v850, 2147483648
  %v863 = vor.u32 1.1754944e-38, %v862
  %v864 = vsel %vm861, %v863, %v859
  %v865 = vmul.f32 1.0, %v864
  %v866 = vmul.f32 %v865, 2.0
  %v867 = vsub.f32 %v866, 1.0
  %v868 = vmul.f32 %v865, %v728
  %870 = vrot.lane.b32.xlu0 %v867, 64
  %v871 = vpop.permute.xlu0 %870
  %v873 = vmul.f32 %v865, %v871
  %875 = vrot.lane.b32.xlu0 %v873, 32
  %v876 = vpop.permute.xlu0 %875
  %v878 = vadd.f32 %v868, %v876
  %v879 = vtanh.pop %v878
  %881 = vrot.lane.b32.xlu0 %v879, 64
  %v882 = vpop.permute.xlu0 %881
  %v884 = vmul.f32 %v865, %v882
  %s885 = scalar_lea.vmem [#allocation2], 40
  %v886 = vld [vmem:[%s885] sm:$0xff]
  %887 = vmatpush.msra.mxu0 0.0
  %888 = vmatpush.msra.mxu0 0.0
  %889 = vmatpush.msra.mxu0 0.0
  %890 = vmatpush.msra.mxu0 0.0
  %891 = vmatpush.msra.mxu0 0.0
  %892 = vmatpush.msra.mxu0 0.0
  %893 = vmatpush.msra.mxu0 0.0
  %894 = vmatpush.msra.mxu0 0.0
  %895 = vmatpush.msra.mxu0 0.0
  %896 = vmatpush.msra.mxu0 0.0
  %897 = vmatpush.msra.mxu0 0.0
  %898 = vmatpush.msra.mxu0 0.0
  %899 = vmatpush.msra.mxu0 %v125
  %900 = vmatpush.msra.mxu0 %v124
  %901 = vmatpush.msra.mxu0 %v123
  %902 = vmatpush.msra.mxu0 %v122
  %903 = vmatmul.f32.gmra.mxu0 %v824
  %v904 = vpop.f32.mrf.mxu0
  %v905 = vadd.f32 0.0, %v904
  %906 = vdwg.mxu0
  %v907 = vadd.f32 %v886, %v905
  %v908 = vxor.u32 %v907, 2147483648
  %v909 = vmul.f32 %v908, 1.442695
  %v910 = vpow.pop %v909
  %v911 = vadd.f32 %v910, 1.0
  %v912 = vrcp.pop %v911
  %v913 = vmul.f32 %v911, %v912
  %v914 = vsub.f32 1.0, %v913
  %v915 = vmul.f32 %v912, %v914
  %v916 = vadd.f32 %v912, %v915
  %vm917 = vweird.f32 %v911
  %vm918 = vweird.f32 %v912
  %vm919 = vmor %vm917, %vm918
  %v920 = vsel %vm919, %v912, %v916
  %v921 = vand.u32 2147483647, %v911
  %vm922 = vcmp.eq.f32.partialorder %v921, 8.507059e+37
  %v923 = vand.u32 %v911, 2147483648
  %v924 = vor.u32 1.1754944e-38, %v923
  %v925 = vsel %vm922, %v924, %v920
  %v926 = vmul.f32 1.0, %v925
  %v927 = vmul.f32 %v926, 2.0
  %v928 = vsub.f32 %v927, 1.0
  %v929 = vmul.f32 %v926, %v789
  %931 = vrot.lane.b32.xlu0 %v928, 64
  %v932 = vpop.permute.xlu0 %931
  %v934 = vmul.f32 %v926, %v932
  %936 = vrot.lane.b32.xlu0 %v934, 32
  %v937 = vpop.permute.xlu0 %936
  %v939 = vadd.f32 %v929, %v937
  %v940 = vtanh.pop %v939
  %942 = vrot.lane.b32.xlu0 %v940, 64
  %v943 = vpop.permute.xlu0 %942
  %v945 = vmul.f32 %v926, %v943
  %947 = vrot.lane.b32.xlu0 %v884, 32
  %v948 = vpop.permute.xlu0 %947
  %v949 = vsel %vm48, %v948, 0
  %951 = vmatpush.msra.mxu0 0.0
  %952 = vmatpush.msra.mxu0 0.0
  %953 = vmatpush.msra.mxu0 0.0
  %954 = vmatpush.msra.mxu0 0.0
  %955 = vmatpush.msra.mxu0 0.0
  %956 = vmatpush.msra.mxu0 0.0
  %957 = vmatpush.msra.mxu0 0.0
  %958 = vmatpush.msra.mxu0 0.0
  %959 = vmatpush.msra.mxu0 0.0
  %960 = vmatpush.msra.mxu0 0.0
  %961 = vmatpush.msra.mxu0 0.0
  %962 = vmatpush.msra.mxu0 0.0
  %963 = vmatpush.msra.mxu0 %v133
  %964 = vmatpush.msra.mxu0 %v132
  %965 = vmatpush.msra.mxu0 %v131
  %966 = vmatpush.msra.mxu0 %v130
  %967 = vmatmul.f32.gmra.mxu0 %v949
  %v968 = vpop.f32.mrf.mxu0
  %v969 = vadd.f32 0.0, %v968
  %970 = vdwg.mxu0
  %972 = vrot.lane.b32.xlu0 %v945, 32
  %v973 = vpop.permute.xlu0 %972
  %v974 = vsel %vm48, %v973, 0
  %976 = vmatpush.msra.mxu0 0.0
  %977 = vmatpush.msra.mxu0 0.0
  %978 = vmatpush.msra.mxu0 0.0
  %979 = vmatpush.msra.mxu0 0.0
  %980 = vmatpush.msra.mxu0 0.0
  %981 = vmatpush.msra.mxu0 0.0
  %982 = vmatpush.msra.mxu0 0.0
  %983 = vmatpush.msra.mxu0 0.0
  %984 = vmatpush.msra.mxu0 0.0
  %985 = vmatpush.msra.mxu0 0.0
  %986 = vmatpush.msra.mxu0 0.0
  %987 = vmatpush.msra.mxu0 0.0
  %988 = vmatpush.msra.mxu0 %v129
  %989 = vmatpush.msra.mxu0 %v128
  %990 = vmatpush.msra.mxu0 %v127
  %991 = vmatpush.msra.mxu0 %v126
  %992 = vmatmul.f32.gmra.mxu0 %v974
  %v993 = vpop.f32.mrf.mxu0
  %v994 = vadd.f32 %v969, %v993
  %995 = vdwg.mxu0
  %v996 = vadd.f32 %v994, %v244
  %v997 = vxor.u32 %v996, 2147483648
  %v998 = vmul.f32 %v997, 1.442695
  %v999 = vpow.pop %v998
  %v1000 = vadd.f32 %v999, 1.0
  %v1001 = vrcp.pop %v1000
  %v1002 = vmul.f32 %v1000, %v1001
  %v1003 = vsub.f32 1.0, %v1002
  %v1004 = vmul.f32 %v1001, %v1003
  %v1005 = vadd.f32 %v1001, %v1004
  %vm1006 = vweird.f32 %v1000
  %vm1007 = vweird.f32 %v1001
  %vm1008 = vmor %vm1006, %vm1007
  %v1009 = vsel %vm1008, %v1001, %v1005
  %v1010 = vand.u32 2147483647, %v1000
  %vm1011 = vcmp.eq.f32.partialorder %v1010, 8.507059e+37
  %v1012 = vand.u32 %v1000, 2147483648
  %v1013 = vor.u32 1.1754944e-38, %v1012
  %v1014 = vsel %vm1011, %v1013, %v1009
  %v1015 = vmul.f32 1.0, %v1014
  %v1016 = vmul.f32 %v1015, 2.0
  %v1017 = vsub.f32 %v1016, 1.0
  %v1018 = vmul.f32 %v1015, %v878
  %1020 = vrot.lane.b32.xlu0 %v1017, 64
  %v1021 = vpop.permute.xlu0 %1020
  %v1023 = vmul.f32 %v1015, %v1021
  %1025 = vrot.lane.b32.xlu0 %v1023, 32
  %v1026 = vpop.permute.xlu0 %1025
  %v1028 = vadd.f32 %v1018, %v1026
  %v1029 = vtanh.pop %v1028
  %1031 = vrot.lane.b32.xlu0 %v1029, 64
  %v1032 = vpop.permute.xlu0 %1031
  %v1034 = vmul.f32 %v1015, %v1032
  %s1035 = scalar_lea.vmem [#allocation2], 48
  %v1036 = vld [vmem:[%s1035] sm:$0xff]
  %1037 = vmatpush.msra.mxu0 0.0
  %1038 = vmatpush.msra.mxu0 0.0
  %1039 = vmatpush.msra.mxu0 0.0
  %1040 = vmatpush.msra.mxu0 0.0
  %1041 = vmatpush.msra.mxu0 0.0
  %1042 = vmatpush.msra.mxu0 0.0
  %1043 = vmatpush.msra.mxu0 0.0
  %1044 = vmatpush.msra.mxu0 0.0
  %1045 = vmatpush.msra.mxu0 0.0
  %1046 = vmatpush.msra.mxu0 0.0
  %1047 = vmatpush.msra.mxu0 0.0
  %1048 = vmatpush.msra.mxu0 0.0
  %1049 = vmatpush.msra.mxu0 %v125
  %1050 = vmatpush.msra.mxu0 %v124
  %1051 = vmatpush.msra.mxu0 %v123
  %1052 = vmatpush.msra.mxu0 %v122
  %1053 = vmatmul.f32.gmra.mxu0 %v974
  %v1054 = vpop.f32.mrf.mxu0
  %v1055 = vadd.f32 0.0, %v1054
  %1056 = vdwg.mxu0
  %v1057 = vadd.f32 %v1036, %v1055
  %v1058 = vxor.u32 %v1057, 2147483648
  %v1059 = vmul.f32 %v1058, 1.442695
  %v1060 = vpow.pop %v1059
  %v1061 = vadd.f32 %v1060, 1.0
  %v1062 = vrcp.pop %v1061
  %v1063 = vmul.f32 %v1061, %v1062
  %v1064 = vsub.f32 1.0, %v1063
  %v1065 = vmul.f32 %v1062, %v1064
  %v1066 = vadd.f32 %v1062, %v1065
  %vm1067 = vweird.f32 %v1061
  %vm1068 = vweird.f32 %v1062
  %vm1069 = vmor %vm1067, %vm1068
  %v1070 = vsel %vm1069, %v1062, %v1066
  %v1071 = vand.u32 2147483647, %v1061
  %vm1072 = vcmp.eq.f32.partialorder %v1071, 8.507059e+37
  %v1073 = vand.u32 %v1061, 2147483648
  %v1074 = vor.u32 1.1754944e-38, %v1073
  %v1075 = vsel %vm1072, %v1074, %v1070
  %v1076 = vmul.f32 1.0, %v1075
  %v1077 = vmul.f32 %v1076, 2.0
  %v1078 = vsub.f32 %v1077, 1.0
  %v1079 = vmul.f32 %v1076, %v939
  %1081 = vrot.lane.b32.xlu0 %v1078, 64
  %v1082 = vpop.permute.xlu0 %1081
  %v1084 = vmul.f32 %v1076, %v1082
  %1086 = vrot.lane.b32.xlu0 %v1084, 32
  %v1087 = vpop.permute.xlu0 %1086
  %v1089 = vadd.f32 %v1079, %v1087
  %v1090 = vtanh.pop %v1089
  %1092 = vrot.lane.b32.xlu0 %v1090, 64
  %v1093 = vpop.permute.xlu0 %1092
  %v1095 = vmul.f32 %v1076, %v1093
  %1097 = vrot.lane.b32.xlu0 %v1034, 32
  %v1098 = vpop.permute.xlu0 %1097
  %v1099 = vsel %vm48, %v1098, 0
  %1101 = vmatpush.msra.mxu0 0.0
  %1102 = vmatpush.msra.mxu0 0.0
  %1103 = vmatpush.msra.mxu0 0.0
  %1104 = vmatpush.msra.mxu0 0.0
  %1105 = vmatpush.msra.mxu0 0.0
  %1106 = vmatpush.msra.mxu0 0.0
  %1107 = vmatpush.msra.mxu0 0.0
  %1108 = vmatpush.msra.mxu0 0.0
  %1109 = vmatpush.msra.mxu0 0.0
  %1110 = vmatpush.msra.mxu0 0.0
  %1111 = vmatpush.msra.mxu0 0.0
  %1112 = vmatpush.msra.mxu0 0.0
  %1113 = vmatpush.msra.mxu0 %v133
  %1114 = vmatpush.msra.mxu0 %v132
  %1115 = vmatpush.msra.mxu0 %v131
  %1116 = vmatpush.msra.mxu0 %v130
  %1117 = vmatmul.f32.gmra.mxu0 %v1099
  %v1118 = vpop.f32.mrf.mxu0
  %v1119 = vadd.f32 0.0, %v1118
  %1120 = vdwg.mxu0
  %1122 = vrot.lane.b32.xlu0 %v1095, 32
  %v1123 = vpop.permute.xlu0 %1122
  %v1124 = vsel %vm48, %v1123, 0
  %1126 = vmatpush.msra.mxu0 0.0
  %1127 = vmatpush.msra.mxu0 0.0
  %1128 = vmatpush.msra.mxu0 0.0
  %1129 = vmatpush.msra.mxu0 0.0
  %1130 = vmatpush.msra.mxu0 0.0
  %1131 = vmatpush.msra.mxu0 0.0
  %1132 = vmatpush.msra.mxu0 0.0
  %1133 = vmatpush.msra.mxu0 0.0
  %1134 = vmatpush.msra.mxu0 0.0
  %1135 = vmatpush.msra.mxu0 0.0
  %1136 = vmatpush.msra.mxu0 0.0
  %1137 = vmatpush.msra.mxu0 0.0
  %1138 = vmatpush.msra.mxu0 %v129
  %1139 = vmatpush.msra.mxu0 %v128
  %1140 = vmatpush.msra.mxu0 %v127
  %1141 = vmatpush.msra.mxu0 %v126
  %1142 = vmatmul.f32.gmra.mxu0 %v1124
  %v1143 = vpop.f32.mrf.mxu0
  %v1144 = vadd.f32 %v1119, %v1143
  %1145 = vdwg.mxu0
  %v1146 = vadd.f32 %v1144, %v244
  %v1147 = vxor.u32 %v1146, 2147483648
  %v1148 = vmul.f32 %v1147, 1.442695
  %v1149 = vpow.pop %v1148
  %v1150 = vadd.f32 %v1149, 1.0
  %v1151 = vrcp.pop %v1150
  %v1152 = vmul.f32 %v1150, %v1151
  %v1153 = vsub.f32 1.0, %v1152
  %v1154 = vmul.f32 %v1151, %v1153
  %v1155 = vadd.f32 %v1151, %v1154
  %vm1156 = vweird.f32 %v1150
  %vm1157 = vweird.f32 %v1151
  %vm1158 = vmor %vm1156, %vm1157
  %v1159 = vsel %vm1158, %v1151, %v1155
  %v1160 = vand.u32 2147483647, %v1150
  %vm1161 = vcmp.eq.f32.partialorder %v1160, 8.507059e+37
  %v1162 = vand.u32 %v1150, 2147483648
  %v1163 = vor.u32 1.1754944e-38, %v1162
  %v1164 = vsel %vm1161, %v1163, %v1159
  %v1165 = vmul.f32 1.0, %v1164
  %v1166 = vmul.f32 %v1165, 2.0
  %v1167 = vsub.f32 %v1166, 1.0
  %v1168 = vmul.f32 %v1165, %v1028
  %1170 = vrot.lane.b32.xlu0 %v1167, 64
  %v1171 = vpop.permute.xlu0 %1170
  %v1173 = vmul.f32 %v1165, %v1171
  %1175 = vrot.lane.b32.xlu0 %v1173, 32
  %v1176 = vpop.permute.xlu0 %1175
  %v1178 = vadd.f32 %v1168, %v1176
  %v1179 = vtanh.pop %v1178
  %1181 = vrot.lane.b32.xlu0 %v1179, 64
  %v1182 = vpop.permute.xlu0 %1181
  %v1184 = vmul.f32 %v1165, %v1182
  %s1185 = scalar_lea.vmem [#allocation2], 56
  %v1186 = vld [vmem:[%s1185] sm:$0xff]
  %1187 = vmatpush.msra.mxu0 0.0
  %1188 = vmatpush.msra.mxu0 0.0
  %1189 = vmatpush.msra.mxu0 0.0
  %1190 = vmatpush.msra.mxu0 0.0
  %1191 = vmatpush.msra.mxu0 0.0
  %1192 = vmatpush.msra.mxu0 0.0
  %1193 = vmatpush.msra.mxu0 0.0
  %1194 = vmatpush.msra.mxu0 0.0
  %1195 = vmatpush.msra.mxu0 0.0
  %1196 = vmatpush.msra.mxu0 0.0
  %1197 = vmatpush.msra.mxu0 0.0
  %1198 = vmatpush.msra.mxu0 0.0
  %1199 = vmatpush.msra.mxu0 %v125
  %1200 = vmatpush.msra.mxu0 %v124
  %1201 = vmatpush.msra.mxu0 %v123
  %1202 = vmatpush.msra.mxu0 %v122
  %1203 = vmatmul.f32.gmra.mxu0 %v1124
  %v1204 = vpop.f32.mrf.mxu0
  %v1205 = vadd.f32 0.0, %v1204
  %1206 = vdwg.mxu0
  %v1207 = vadd.f32 %v1186, %v1205
  %v1208 = vxor.u32 %v1207, 2147483648
  %v1209 = vmul.f32 %v1208, 1.442695
  %v1210 = vpow.pop %v1209
  %v1211 = vadd.f32 %v1210, 1.0
  %v1212 = vrcp.pop %v1211
  %v1213 = vmul.f32 %v1211, %v1212
  %v1214 = vsub.f32 1.0, %v1213
  %v1215 = vmul.f32 %v1212, %v1214
  %v1216 = vadd.f32 %v1212, %v1215
  %vm1217 = vweird.f32 %v1211
  %vm1218 = vweird.f32 %v1212
  %vm1219 = vmor %vm1217, %vm1218
  %v1220 = vsel %vm1219, %v1212, %v1216
  %v1221 = vand.u32 2147483647, %v1211
  %vm1222 = vcmp.eq.f32.partialorder %v1221, 8.507059e+37
  %v1223 = vand.u32 %v1211, 2147483648
  %v1224 = vor.u32 1.1754944e-38, %v1223
  %v1225 = vsel %vm1222, %v1224, %v1220
  %v1226 = vmul.f32 1.0, %v1225
  %v1227 = vmul.f32 %v1226, 2.0
  %v1228 = vsub.f32 %v1227, 1.0
  %v1229 = vmul.f32 %v1226, %v1089
  %1231 = vrot.lane.b32.xlu0 %v1228, 64
  %v1232 = vpop.permute.xlu0 %1231
  %v1234 = vmul.f32 %v1226, %v1232
  %1236 = vrot.lane.b32.xlu0 %v1234, 32
  %v1237 = vpop.permute.xlu0 %1236
  %v1239 = vadd.f32 %v1229, %v1237
  %v1240 = vtanh.pop %v1239
  %1242 = vrot.lane.b32.xlu0 %v1240, 64
  %v1243 = vpop.permute.xlu0 %1242
  %v1245 = vmul.f32 %v1226, %v1243
  %1247 = vrot.lane.b32.xlu0 %v1184, 32
  %v1248 = vpop.permute.xlu0 %1247
  %v1249 = vsel %vm48, %v1248, 0
  %1251 = vmatpush.msra.mxu0 0.0
  %1252 = vmatpush.msra.mxu0 0.0
  %1253 = vmatpush.msra.mxu0 0.0
  %1254 = vmatpush.msra.mxu0 0.0
  %1255 = vmatpush.msra.mxu0 0.0
  %1256 = vmatpush.msra.mxu0 0.0
  %1257 = vmatpush.msra.mxu0 0.0
  %1258 = vmatpush.msra.mxu0 0.0
  %1259 = vmatpush.msra.mxu0 0.0
  %1260 = vmatpush.msra.mxu0 0.0
  %1261 = vmatpush.msra.mxu0 0.0
  %1262 = vmatpush.msra.mxu0 0.0
  %1263 = vmatpush.msra.mxu0 %v133
  %1264 = vmatpush.msra.mxu0 %v132
  %1265 = vmatpush.msra.mxu0 %v131
  %1266 = vmatpush.msra.mxu0 %v130
  %1267 = vmatmul.f32.gmra.mxu0 %v1249
  %v1268 = vpop.f32.mrf.mxu0
  %v1269 = vadd.f32 0.0, %v1268
  %1270 = vdwg.mxu0
  %1272 = vrot.lane.b32.xlu0 %v1245, 32
  %v1273 = vpop.permute.xlu0 %1272
  %v1274 = vsel %vm48, %v1273, 0
  %1276 = vmatpush.msra.mxu0 0.0
  %1277 = vmatpush.msra.mxu0 0.0
  %1278 = vmatpush.msra.mxu0 0.0
  %1279 = vmatpush.msra.mxu0 0.0
  %1280 = vmatpush.msra.mxu0 0.0
  %1281 = vmatpush.msra.mxu0 0.0
  %1282 = vmatpush.msra.mxu0 0.0
  %1283 = vmatpush.msra.mxu0 0.0
  %1284 = vmatpush.msra.mxu0 0.0
  %1285 = vmatpush.msra.mxu0 0.0
  %1286 = vmatpush.msra.mxu0 0.0
  %1287 = vmatpush.msra.mxu0 0.0
  %1288 = vmatpush.msra.mxu0 %v129
  %1289 = vmatpush.msra.mxu0 %v128
  %1290 = vmatpush.msra.mxu0 %v127
  %1291 = vmatpush.msra.mxu0 %v126
  %1292 = vmatmul.f32.gmra.mxu0 %v1274
  %v1293 = vpop.f32.mrf.mxu0
  %v1294 = vadd.f32 %v1269, %v1293
  %1295 = vdwg.mxu0
  %v1296 = vadd.f32 %v1294, %v244
  %v1297 = vxor.u32 %v1296, 2147483648
  %v1298 = vmul.f32 %v1297, 1.442695
  %v1299 = vpow.pop %v1298
  %v1300 = vadd.f32 %v1299, 1.0
  %v1301 = vrcp.pop %v1300
  %v1302 = vmul.f32 %v1300, %v1301
  %v1303 = vsub.f32 1.0, %v1302
  %v1304 = vmul.f32 %v1301, %v1303
  %v1305 = vadd.f32 %v1301, %v1304
  %vm1306 = vweird.f32 %v1300
  %vm1307 = vweird.f32 %v1301
  %vm1308 = vmor %vm1306, %vm1307
  %v1309 = vsel %vm1308, %v1301, %v1305
  %v1310 = vand.u32 2147483647, %v1300
  %vm1311 = vcmp.eq.f32.partialorder %v1310, 8.507059e+37
  %v1312 = vand.u32 %v1300, 2147483648
  %v1313 = vor.u32 1.1754944e-38, %v1312
  %v1314 = vsel %vm1311, %v1313, %v1309
  %v1315 = vmul.f32 1.0, %v1314
  %v1316 = vmul.f32 %v1315, 2.0
  %v1317 = vsub.f32 %v1316, 1.0
  %v1318 = vmul.f32 %v1315, %v1178
  %1320 = vrot.lane.b32.xlu0 %v1317, 64
  %v1321 = vpop.permute.xlu0 %1320
  %v1323 = vmul.f32 %v1315, %v1321
  %1325 = vrot.lane.b32.xlu0 %v1323, 32
  %v1326 = vpop.permute.xlu0 %1325
  %v1328 = vadd.f32 %v1318, %v1326
  %v1329 = vtanh.pop %v1328
  %1331 = vrot.lane.b32.xlu0 %v1329, 64
  %v1332 = vpop.permute.xlu0 %1331
  %v1334 = vmul.f32 %v1315, %v1332
  %v1335 = vld [vmem:[%s7] sm:$0xff]
  %v1336 = vld [vmem:[%s7 + $0x8] sm:$0xff]
  %v1337 = vld [vmem:[%s7 + $0x10] sm:$0xff]
  %v1338 = vld [vmem:[%s7 + $0x18] sm:$0xff]
  %v1339 = vld [vmem:[%s8] sm:$0x1]
  %v1341 = vperm.slane %v1339, 0
  %1344 = vrot.lane.b32.xlu0 %v1334, 32
  %v1345 = vpop.permute.xlu0 %1344
  %v1346 = vsel %vm48, %v1345, 0
  %1348 = vmatpush.msra.mxu0 0.0
  %1349 = vmatpush.msra.mxu0 0.0
  %1350 = vmatpush.msra.mxu0 0.0
  %1351 = vmatpush.msra.mxu0 0.0
  %1352 = vmatpush.msra.mxu0 0.0
  %1353 = vmatpush.msra.mxu0 0.0
  %1354 = vmatpush.msra.mxu0 0.0
  %1355 = vmatpush.msra.mxu0 0.0
  %1356 = vmatpush.msra.mxu0 0.0
  %1357 = vmatpush.msra.mxu0 0.0
  %1358 = vmatpush.msra.mxu0 0.0
  %1359 = vmatpush.msra.mxu0 0.0
  %1360 = vmatpush.msra.mxu0 %v1338
  %1361 = vmatpush.msra.mxu0 %v1337
  %1362 = vmatpush.msra.mxu0 %v1336
  %1363 = vmatpush.msra.mxu0 %v1335
  %1364 = vmatmul.f32.gmra.mxu0 %v1346
  %v1365 = vpop.f32.mrf.mxu0
  %v1366 = vadd.f32 %v1341, %v1365
  %1367 = vdwg.mxu0
  %1368 = vst [vmem:[%s9] sm:$0xff] %v1366
  // Predicated region
  $region38: #{enhanced_lstm_forward.1} parent=0 // pred_check
    _
  $region39: #{enhanced_lstm_forward.1} parent=0 // pred_check_branch
    %1370 = sbr.rel (0) target = $region41
  $region40: #{enhanced_lstm_forward.1} parent=0 // pred_region
    _
  $region41: #{enhanced_lstm_forward.1} parent=0 // pred_fallthru
    _
  // Predicated region
  $region42: #{enhanced_lstm_forward.1} parent=0 // pred_check
    _
  $region43: #{enhanced_lstm_forward.1} parent=0 // pred_check_branch
    %1372 = sbr.rel (0) target = $region45
  $region44: #{enhanced_lstm_forward.1} parent=0 // pred_region
    _
  $region45: #{enhanced_lstm_forward.1} parent=0 // pred_fallthru
    _

</llo_original>
